<compile_context>
chip_gen: v7x
topology: tpu7x:2x2x1
jax: 0.10.0
libtpu: 0.0.40
codegen_flags: <defaults>
</compile_context>

<pallas_src>
import functools

import jax
import jax.numpy as jnp
import numpy as np
from jax.experimental import pallas as pl
from jax.experimental.pallas import tpu as pltpu


def attention_kernel(q_ref, k_ref, v_ref,
                     wq_ref, wk_ref, wv_ref, wo_ref,
                     bq_ref, bk_ref, bv_ref, bo_ref,
                     out_ref, *, nb_head, scale):
    """Processes one batch element per grid step; all heads handled in-kernel."""
    xq = q_ref[0]            # (L, D)  bf16
    xk = k_ref[0]            # (S, D)  bf16
    xv = v_ref[0]            # (S, D)  bf16

    # Full-width projections: (L,D)@(D,P), f32 accumulation, lane-dense bias add.
    q = jnp.dot(xq, wq_ref[...], preferred_element_type=jnp.float32) + bq_ref[...]   # (L, P)
    k = jnp.dot(xk, wk_ref[...], preferred_element_type=jnp.float32) + bk_ref[...]   # (S, P)
    v = jnp.dot(xv, wv_ref[...], preferred_element_type=jnp.float32) + bv_ref[...]   # (S, P)

    # Cast once per tensor (v5e has no bf16 VPU — avoid redundant casts).
    q_b = q.astype(jnp.bfloat16)
    k_b = k.astype(jnp.bfloat16)
    v_b = v.astype(jnp.bfloat16)

    P = q.shape[-1]
    E = P // nb_head

    # Per-head scaled-dot-product attention (static unroll; tiny (L,S) tiles).
    ctx_parts = []
    for h in range(nb_head):
        qh = q_b[:, h * E:(h + 1) * E]                                   # (L, E)
        kh = k_b[:, h * E:(h + 1) * E]                                   # (S, E)
        vh = v_b[:, h * E:(h + 1) * E]                                   # (S, E)

        # Scores: contract over E -> (L, S).
        s = jax.lax.dot_general(
            qh, kh, (((1,), (1,)), ((), ())),
            preferred_element_type=jnp.float32) * scale

        # Softmax over the key axis (f32; EUP reciprocal for the denominator).
        m = jnp.max(s, axis=-1, keepdims=True)
        e = jnp.exp(s - m)
        a = e * pl.reciprocal(jnp.sum(e, axis=-1, keepdims=True), approx=True)

        ctx_parts.append(
            jnp.dot(a.astype(jnp.bfloat16), vh,
                    preferred_element_type=jnp.float32))                 # (L, E)

    # Re-pack heads to a lane-dense (L, P) slab and do one MXU-shaped out-proj.
    ctx = jnp.concatenate(ctx_parts, axis=-1).astype(jnp.bfloat16)       # (L, P)
    out_ref[0] = (jnp.dot(ctx, wo_ref[...], preferred_element_type=jnp.float32)
                  + bo_ref[...])                                          # (L, D)


def attention_forward(queries, keys, values, params, *, nb_head):
    """queries: (B, L, D), keys/values: (B, S, D). Returns (B, L, D) float32."""
    B, L, D = queries.shape
    _, S, _ = keys.shape
    P = params["wq"].shape[1]
    E = P // nb_head
    scale = 1.0 / float(np.sqrt(E))

    bf16, f32 = jnp.bfloat16, jnp.float32

    # bf16 matmul inputs (halves activation/weight DMA; f32 accumulation in-kernel).
    q_in = queries.astype(bf16)
    k_in = keys.astype(bf16)
    v_in = values.astype(bf16)

    # Weights stay in (in, out) layout — no per-head repack needed anymore.
    wq = params["wq"].astype(bf16)          # (D, P)
    wk = params["wk"].astype(bf16)
    wv = params["wv"].astype(bf16)
    wo = params["wo"].astype(bf16)          # (P, D)

    bq = params["bq"].reshape(1, P).astype(f32)
    bk = params["bk"].reshape(1, P).astype(f32)
    bv = params["bv"].reshape(1, P).astype(f32)
    bo = params["bo"].reshape(1, D).astype(f32)

    kernel = functools.partial(attention_kernel, nb_head=nb_head, scale=scale)

    resident2d = lambda shape: pl.BlockSpec(shape, lambda b: (0, 0))

    out = pl.pallas_call(
        kernel,
        out_shape=jax.ShapeDtypeStruct((B, L, D), f32),
        grid=(B,),
        in_specs=[
            pl.BlockSpec((1, L, D), lambda b: (b, 0, 0)),   # queries
            pl.BlockSpec((1, S, D), lambda b: (b, 0, 0)),   # keys
            pl.BlockSpec((1, S, D), lambda b: (b, 0, 0)),   # values
            resident2d((D, P)),                             # wq (VMEM-resident)
            resident2d((D, P)),                             # wk
            resident2d((D, P)),                             # wv
            resident2d((P, D)),                             # wo
            resident2d((1, P)),                             # bq
            resident2d((1, P)),                             # bk
            resident2d((1, P)),                             # bv
            resident2d((1, D)),                             # bo
        ],
        out_specs=pl.BlockSpec((1, L, D), lambda b: (b, 0, 0)),
        compiler_params=pltpu.CompilerParams(
            dimension_semantics=("parallel",)),
    )(q_in, k_in, v_in, wq, wk, wv, wo, bq, bk, bv, bo)

    return out


def init_params(key, *, D, proj_dim):
    """Deterministic synthetic Linear params, stored as (in, out) / (out,)."""
    ks = jax.random.split(key, 8)

    def w(k, shape, s=0.05):
        return (s * jax.random.normal(k, shape)).astype(jnp.float32)

    return {
        "wq": w(ks[0], (D, proj_dim)), "bq": w(ks[1], (proj_dim,)),
        "wk": w(ks[2], (D, proj_dim)), "bk": w(ks[3], (proj_dim,)),
        "wv": w(ks[4], (D, proj_dim)), "bv": w(ks[5], (proj_dim,)),
        "wo": w(ks[6], (proj_dim, D)), "bo": w(ks[7], (D,)),
    }


def reference_forward(queries, keys, values, p, *, nb_head):
    """Pure-JAX f32 reference mirroring the PyTorch Attention module."""
    B, L, D = queries.shape
    _, S, _ = keys.shape
    P = p["wq"].shape[1]
    E = P // nb_head
    scale = 1.0 / np.sqrt(E)

    q = (queries @ p["wq"] + p["bq"]).reshape(B, L, nb_head, E)
    k = (keys @ p["wk"] + p["bk"]).reshape(B, S, nb_head, E)
    v = (values @ p["wv"] + p["bv"]).reshape(B, S, nb_head, E)
    s = jnp.einsum("blhe,bshe->bhls", q, k) * scale
    a = jax.nn.softmax(s, axis=-1)
    o = jnp.einsum("bhls,bshe->blhe", a, v).reshape(B, L, P)
    return o @ p["wo"] + p["bo"]


if __name__ == "__main__":
    # Small, lane-dense shapes consistent with Attention(D, proj_dim, nb_head).
    B, L, S, D, proj_dim, nb_head = 2, 16, 16, 128, 128, 8

    key = jax.random.PRNGKey(0)
    kq, kk, kv, kp = jax.random.split(key, 4)
    queries = jax.random.normal(kq, (B, L, D), dtype=jnp.float32)
    keys = jax.random.normal(kk, (B, S, D), dtype=jnp.float32)
    values = jax.random.normal(kv, (B, S, D), dtype=jnp.float32)
    params = init_params(kp, D=D, proj_dim=proj_dim)

    y = attention_forward(queries, keys, values, params, nb_head=nb_head)
    y = jax.block_until_ready(y)

    y_ref = jax.block_until_ready(
        reference_forward(queries, keys, values, params, nb_head=nb_head))
    # bf16 matmul inputs (f32 accumulate) -> looser tolerance than pure f32.
    np.testing.assert_allclose(np.asarray(y), np.asarray(y_ref), rtol=2e-2, atol=2e-2)
    assert y.shape == (B, L, D)

    print("KERNEL_OK")
</pallas_src>

<mosaic_0001>
module attributes {stable_mosaic.version = 11 : i64} {
  func.func @attention_kernel(%arg0: i32, %arg1: memref<1x16x128xbf16, #tpu.memory_space<vmem>>, %arg2: memref<1x16x128xbf16, #tpu.memory_space<vmem>>, %arg3: memref<1x16x128xbf16, #tpu.memory_space<vmem>>, %arg4: memref<128x128xbf16, #tpu.memory_space<vmem>>, %arg5: memref<128x128xbf16, #tpu.memory_space<vmem>>, %arg6: memref<128x128xbf16, #tpu.memory_space<vmem>>, %arg7: memref<128x128xbf16, #tpu.memory_space<vmem>>, %arg8: memref<1x128xf32, #tpu.memory_space<vmem>>, %arg9: memref<1x128xf32, #tpu.memory_space<vmem>>, %arg10: memref<1x128xf32, #tpu.memory_space<vmem>>, %arg11: memref<1x128xf32, #tpu.memory_space<vmem>>, %arg12: memref<1x16x128xf32, #tpu.memory_space<vmem>>) attributes {dimension_semantics = [#tpu.dimension_semantics<parallel>], iteration_bounds = array<i64: 2>, scalar_prefetch = 0 : i64, scratch_operands = 0 : i64, tpu.core_type = #tpu.core_type<tc>, window_params = [{transform_indices = @transform_0, window_bounds = array<i64: 1, 16, 128>}, {transform_indices = @transform_1, window_bounds = array<i64: 1, 16, 128>}, {transform_indices = @transform_2, window_bounds = array<i64: 1, 16, 128>}, {pipeline_mode = #tpu.pipeline_mode<synchronous>, transform_indices = @transform_3, window_bounds = array<i64: 128, 128>}, {pipeline_mode = #tpu.pipeline_mode<synchronous>, transform_indices = @transform_4, window_bounds = array<i64: 128, 128>}, {pipeline_mode = #tpu.pipeline_mode<synchronous>, transform_indices = @transform_5, window_bounds = array<i64: 128, 128>}, {pipeline_mode = #tpu.pipeline_mode<synchronous>, transform_indices = @transform_6, window_bounds = array<i64: 128, 128>}, {pipeline_mode = #tpu.pipeline_mode<synchronous>, transform_indices = @transform_7, window_bounds = array<i64: 1, 128>}, {pipeline_mode = #tpu.pipeline_mode<synchronous>, transform_indices = @transform_8, window_bounds = array<i64: 1, 128>}, {pipeline_mode = #tpu.pipeline_mode<synchronous>, transform_indices = @transform_9, window_bounds = array<i64: 1, 128>}, {pipeline_mode = #tpu.pipeline_mode<synchronous>, transform_indices = @transform_10, window_bounds = array<i64: 1, 128>}, {transform_indices = @transform_11, window_bounds = array<i64: 1, 16, 128>}]} {
    %c0 = arith.constant 0 : index
    %c0_0 = arith.constant 0 : index
    %c0_1 = arith.constant 0 : index
    %0 = vector.load %arg1[%c0, %c0_0, %c0_1] : memref<1x16x128xbf16, #tpu.memory_space<vmem>>, vector<1x16x128xbf16>
    %1 = vector.shape_cast %0 : vector<1x16x128xbf16> to vector<16x128xbf16>
    %c0_2 = arith.constant 0 : index
    %c0_3 = arith.constant 0 : index
    %c0_4 = arith.constant 0 : index
    %2 = vector.load %arg2[%c0_2, %c0_3, %c0_4] : memref<1x16x128xbf16, #tpu.memory_space<vmem>>, vector<1x16x128xbf16>
    %3 = vector.shape_cast %2 : vector<1x16x128xbf16> to vector<16x128xbf16>
    %c0_5 = arith.constant 0 : index
    %c0_6 = arith.constant 0 : index
    %c0_7 = arith.constant 0 : index
    %4 = vector.load %arg3[%c0_5, %c0_6, %c0_7] : memref<1x16x128xbf16, #tpu.memory_space<vmem>>, vector<1x16x128xbf16>
    %5 = vector.shape_cast %4 : vector<1x16x128xbf16> to vector<16x128xbf16>
    %c0_8 = arith.constant 0 : index
    %c0_9 = arith.constant 0 : index
    %6 = vector.load %arg4[%c0_8, %c0_9] : memref<128x128xbf16, #tpu.memory_space<vmem>>, vector<128x128xbf16>
    %cst = arith.constant dense<0.000000e+00> : vector<16x128xf32>
    %7 = tpu.matmul %1, %6, %cst {dimension_numbers = #tpu.dot_dimension_numbers<[1], [0], [0], [1], [0, 0, 1, 1], [], []>} : vector<16x128xbf16>, vector<128x128xbf16>, vector<16x128xf32> -> vector<16x128xf32>
    %c0_10 = arith.constant 0 : index
    %c0_11 = arith.constant 0 : index
    %8 = vector.load %arg8[%c0_10, %c0_11] : memref<1x128xf32, #tpu.memory_space<vmem>>, vector<1x128xf32>
    %9 = vector.broadcast %8 : vector<1x128xf32> to vector<16x128xf32>
    %10 = arith.addf %7, %9 : vector<16x128xf32>
    %c0_12 = arith.constant 0 : index
    %c0_13 = arith.constant 0 : index
    %11 = vector.load %arg5[%c0_12, %c0_13] : memref<128x128xbf16, #tpu.memory_space<vmem>>, vector<128x128xbf16>
    %cst_14 = arith.constant dense<0.000000e+00> : vector<16x128xf32>
    %12 = tpu.matmul %3, %11, %cst_14 {dimension_numbers = #tpu.dot_dimension_numbers<[1], [0], [0], [1], [0, 0, 1, 1], [], []>} : vector<16x128xbf16>, vector<128x128xbf16>, vector<16x128xf32> -> vector<16x128xf32>
    %c0_15 = arith.constant 0 : index
    %c0_16 = arith.constant 0 : index
    %13 = vector.load %arg9[%c0_15, %c0_16] : memref<1x128xf32, #tpu.memory_space<vmem>>, vector<1x128xf32>
    %14 = vector.broadcast %13 : vector<1x128xf32> to vector<16x128xf32>
    %15 = arith.addf %12, %14 : vector<16x128xf32>
    %c0_17 = arith.constant 0 : index
    %c0_18 = arith.constant 0 : index
    %16 = vector.load %arg6[%c0_17, %c0_18] : memref<128x128xbf16, #tpu.memory_space<vmem>>, vector<128x128xbf16>
    %cst_19 = arith.constant dense<0.000000e+00> : vector<16x128xf32>
    %17 = tpu.matmul %5, %16, %cst_19 {dimension_numbers = #tpu.dot_dimension_numbers<[1], [0], [0], [1], [0, 0, 1, 1], [], []>} : vector<16x128xbf16>, vector<128x128xbf16>, vector<16x128xf32> -> vector<16x128xf32>
    %c0_20 = arith.constant 0 : index
    %c0_21 = arith.constant 0 : index
    %18 = vector.load %arg10[%c0_20, %c0_21] : memref<1x128xf32, #tpu.memory_space<vmem>>, vector<1x128xf32>
    %19 = vector.broadcast %18 : vector<1x128xf32> to vector<16x128xf32>
    %20 = arith.addf %17, %19 : vector<16x128xf32>
    %21 = arith.truncf %10 : vector<16x128xf32> to vector<16x128xbf16>
    %22 = arith.truncf %15 : vector<16x128xf32> to vector<16x128xbf16>
    %23 = arith.truncf %20 : vector<16x128xf32> to vector<16x128xbf16>
    %24 = vector.extract_strided_slice %21 {offsets = [0, 0], sizes = [16, 16], strides = [1, 1]} : vector<16x128xbf16> to vector<16x16xbf16>
    %25 = vector.extract_strided_slice %22 {offsets = [0, 0], sizes = [16, 16], strides = [1, 1]} : vector<16x128xbf16> to vector<16x16xbf16>
    %26 = vector.extract_strided_slice %23 {offsets = [0, 0], sizes = [16, 16], strides = [1, 1]} : vector<16x128xbf16> to vector<16x16xbf16>
    %cst_22 = arith.constant dense<0.000000e+00> : vector<16x16xf32>
    %27 = tpu.matmul %24, %25, %cst_22 {dimension_numbers = #tpu.dot_dimension_numbers<[1], [1], [0], [0], [0, 0, 1, 0], [], []>} : vector<16x16xbf16>, vector<16x16xbf16>, vector<16x16xf32> -> vector<16x16xf32>
    %cst_23 = arith.constant 2.500000e-01 : f32
    %28 = vector.broadcast %cst_23 : f32 to vector<16x16xf32>
    %29 = arith.mulf %27, %28 : vector<16x16xf32>
    %cst_24 = arith.constant dense<0xFF800000> : vector<16xf32>
    %30 = vector.multi_reduction <maximumf>, %29, %cst_24 [1] : vector<16x16xf32> to vector<16xf32>
    %31 = vector.shape_cast %30 : vector<16xf32> to vector<16x1xf32>
    %32 = vector.broadcast %31 : vector<16x1xf32> to vector<16x16xf32>
    %33 = arith.subf %29, %32 : vector<16x16xf32>
    %34 = math.exp %33 : vector<16x16xf32>
    %cst_25 = arith.constant dense<0.000000e+00> : vector<16xf32>
    %35 = vector.multi_reduction <add>, %34, %cst_25 [1] : vector<16x16xf32> to vector<16xf32>
    %36 = vector.shape_cast %35 : vector<16xf32> to vector<16x1xf32>
    %37 = tpu.reciprocal %36 {approx = true} : vector<16x1xf32> -> vector<16x1xf32>
    %38 = vector.broadcast %37 : vector<16x1xf32> to vector<16x16xf32>
    %39 = arith.mulf %34, %38 : vector<16x16xf32>
    %40 = arith.truncf %39 : vector<16x16xf32> to vector<16x16xbf16>
    %cst_26 = arith.constant dense<0.000000e+00> : vector<16x16xf32>
    %41 = tpu.matmul %40, %26, %cst_26 {dimension_numbers = #tpu.dot_dimension_numbers<[1], [0], [0], [1], [0, 0, 1, 1], [], []>} : vector<16x16xbf16>, vector<16x16xbf16>, vector<16x16xf32> -> vector<16x16xf32>
    %42 = vector.extract_strided_slice %21 {offsets = [0, 16], sizes = [16, 16], strides = [1, 1]} : vector<16x128xbf16> to vector<16x16xbf16>
    %43 = vector.extract_strided_slice %22 {offsets = [0, 16], sizes = [16, 16], strides = [1, 1]} : vector<16x128xbf16> to vector<16x16xbf16>
    %44 = vector.extract_strided_slice %23 {offsets = [0, 16], sizes = [16, 16], strides = [1, 1]} : vector<16x128xbf16> to vector<16x16xbf16>
    %cst_27 = arith.constant dense<0.000000e+00> : vector<16x16xf32>
    %45 = tpu.matmul %42, %43, %cst_27 {dimension_numbers = #tpu.dot_dimension_numbers<[1], [1], [0], [0], [0, 0, 1, 0], [], []>} : vector<16x16xbf16>, vector<16x16xbf16>, vector<16x16xf32> -> vector<16x16xf32>
    %cst_28 = arith.constant 2.500000e-01 : f32
    %46 = vector.broadcast %cst_28 : f32 to vector<16x16xf32>
    %47 = arith.mulf %45, %46 : vector<16x16xf32>
    %cst_29 = arith.constant dense<0xFF800000> : vector<16xf32>
    %48 = vector.multi_reduction <maximumf>, %47, %cst_29 [1] : vector<16x16xf32> to vector<16xf32>
    %49 = vector.shape_cast %48 : vector<16xf32> to vector<16x1xf32>
    %50 = vector.broadcast %49 : vector<16x1xf32> to vector<16x16xf32>
    %51 = arith.subf %47, %50 : vector<16x16xf32>
    %52 = math.exp %51 : vector<16x16xf32>
    %cst_30 = arith.constant dense<0.000000e+00> : vector<16xf32>
    %53 = vector.multi_reduction <add>, %52, %cst_30 [1] : vector<16x16xf32> to vector<16xf32>
    %54 = vector.shape_cast %53 : vector<16xf32> to vector<16x1xf32>
    %55 = tpu.reciprocal %54 {approx = true} : vector<16x1xf32> -> vector<16x1xf32>
    %56 = vector.broadcast %55 : vector<16x1xf32> to vector<16x16xf32>
    %57 = arith.mulf %52, %56 : vector<16x16xf32>
    %58 = arith.truncf %57 : vector<16x16xf32> to vector<16x16xbf16>
    %cst_31 = arith.constant dense<0.000000e+00> : vector<16x16xf32>
    %59 = tpu.matmul %58, %44, %cst_31 {dimension_numbers = #tpu.dot_dimension_numbers<[1], [0], [0], [1], [0, 0, 1, 1], [], []>} : vector<16x16xbf16>, vector<16x16xbf16>, vector<16x16xf32> -> vector<16x16xf32>
    %60 = vector.extract_strided_slice %21 {offsets = [0, 32], sizes = [16, 16], strides = [1, 1]} : vector<16x128xbf16> to vector<16x16xbf16>
    %61 = vector.extract_strided_slice %22 {offsets = [0, 32], sizes = [16, 16], strides = [1, 1]} : vector<16x128xbf16> to vector<16x16xbf16>
    %62 = vector.extract_strided_slice %23 {offsets = [0, 32], sizes = [16, 16], strides = [1, 1]} : vector<16x128xbf16> to vector<16x16xbf16>
    %cst_32 = arith.constant dense<0.000000e+00> : vector<16x16xf32>
    %63 = tpu.matmul %60, %61, %cst_32 {dimension_numbers = #tpu.dot_dimension_numbers<[1], [1], [0], [0], [0, 0, 1, 0], [], []>} : vector<16x16xbf16>, vector<16x16xbf16>, vector<16x16xf32> -> vector<16x16xf32>
    %cst_33 = arith.constant 2.500000e-01 : f32
    %64 = vector.broadcast %cst_33 : f32 to vector<16x16xf32>
    %65 = arith.mulf %63, %64 : vector<16x16xf32>
    %cst_34 = arith.constant dense<0xFF800000> : vector<16xf32>
    %66 = vector.multi_reduction <maximumf>, %65, %cst_34 [1] : vector<16x16xf32> to vector<16xf32>
    %67 = vector.shape_cast %66 : vector<16xf32> to vector<16x1xf32>
    %68 = vector.broadcast %67 : vector<16x1xf32> to vector<16x16xf32>
    %69 = arith.subf %65, %68 : vector<16x16xf32>
    %70 = math.exp %69 : vector<16x16xf32>
    %cst_35 = arith.constant dense<0.000000e+00> : vector<16xf32>
    %71 = vector.multi_reduction <add>, %70, %cst_35 [1] : vector<16x16xf32> to vector<16xf32>
    %72 = vector.shape_cast %71 : vector<16xf32> to vector<16x1xf32>
    %73 = tpu.reciprocal %72 {approx = true} : vector<16x1xf32> -> vector<16x1xf32>
    %74 = vector.broadcast %73 : vector<16x1xf32> to vector<16x16xf32>
    %75 = arith.mulf %70, %74 : vector<16x16xf32>
    %76 = arith.truncf %75 : vector<16x16xf32> to vector<16x16xbf16>
    %cst_36 = arith.constant dense<0.000000e+00> : vector<16x16xf32>
    %77 = tpu.matmul %76, %62, %cst_36 {dimension_numbers = #tpu.dot_dimension_numbers<[1], [0], [0], [1], [0, 0, 1, 1], [], []>} : vector<16x16xbf16>, vector<16x16xbf16>, vector<16x16xf32> -> vector<16x16xf32>
    %78 = vector.extract_strided_slice %21 {offsets = [0, 48], sizes = [16, 16], strides = [1, 1]} : vector<16x128xbf16> to vector<16x16xbf16>
    %79 = vector.extract_strided_slice %22 {offsets = [0, 48], sizes = [16, 16], strides = [1, 1]} : vector<16x128xbf16> to vector<16x16xbf16>
    %80 = vector.extract_strided_slice %23 {offsets = [0, 48], sizes = [16, 16], strides = [1, 1]} : vector<16x128xbf16> to vector<16x16xbf16>
    %cst_37 = arith.constant dense<0.000000e+00> : vector<16x16xf32>
    %81 = tpu.matmul %78, %79, %cst_37 {dimension_numbers = #tpu.dot_dimension_numbers<[1], [1], [0], [0], [0, 0, 1, 0], [], []>} : vector<16x16xbf16>, vector<16x16xbf16>, vector<16x16xf32> -> vector<16x16xf32>
    %cst_38 = arith.constant 2.500000e-01 : f32
    %82 = vector.broadcast %cst_38 : f32 to vector<16x16xf32>
    %83 = arith.mulf %81, %82 : vector<16x16xf32>
    %cst_39 = arith.constant dense<0xFF800000> : vector<16xf32>
    %84 = vector.multi_reduction <maximumf>, %83, %cst_39 [1] : vector<16x16xf32> to vector<16xf32>
    %85 = vector.shape_cast %84 : vector<16xf32> to vector<16x1xf32>
    %86 = vector.broadcast %85 : vector<16x1xf32> to vector<16x16xf32>
    %87 = arith.subf %83, %86 : vector<16x16xf32>
    %88 = math.exp %87 : vector<16x16xf32>
    %cst_40 = arith.constant dense<0.000000e+00> : vector<16xf32>
    %89 = vector.multi_reduction <add>, %88, %cst_40 [1] : vector<16x16xf32> to vector<16xf32>
    %90 = vector.shape_cast %89 : vector<16xf32> to vector<16x1xf32>
    %91 = tpu.reciprocal %90 {approx = true} : vector<16x1xf32> -> vector<16x1xf32>
    %92 = vector.broadcast %91 : vector<16x1xf32> to vector<16x16xf32>
    %93 = arith.mulf %88, %92 : vector<16x16xf32>
    %94 = arith.truncf %93 : vector<16x16xf32> to vector<16x16xbf16>
    %cst_41 = arith.constant dense<0.000000e+00> : vector<16x16xf32>
    %95 = tpu.matmul %94, %80, %cst_41 {dimension_numbers = #tpu.dot_dimension_numbers<[1], [0], [0], [1], [0, 0, 1, 1], [], []>} : vector<16x16xbf16>, vector<16x16xbf16>, vector<16x16xf32> -> vector<16x16xf32>
    %96 = vector.extract_strided_slice %21 {offsets = [0, 64], sizes = [16, 16], strides = [1, 1]} : vector<16x128xbf16> to vector<16x16xbf16>
    %97 = vector.extract_strided_slice %22 {offsets = [0, 64], sizes = [16, 16], strides = [1, 1]} : vector<16x128xbf16> to vector<16x16xbf16>
    %98 = vector.extract_strided_slice %23 {offsets = [0, 64], sizes = [16, 16], strides = [1, 1]} : vector<16x128xbf16> to vector<16x16xbf16>
    %cst_42 = arith.constant dense<0.000000e+00> : vector<16x16xf32>
    %99 = tpu.matmul %96, %97, %cst_42 {dimension_numbers = #tpu.dot_dimension_numbers<[1], [1], [0], [0], [0, 0, 1, 0], [], []>} : vector<16x16xbf16>, vector<16x16xbf16>, vector<16x16xf32> -> vector<16x16xf32>
    %cst_43 = arith.constant 2.500000e-01 : f32
    %100 = vector.broadcast %cst_43 : f32 to vector<16x16xf32>
    %101 = arith.mulf %99, %100 : vector<16x16xf32>
    %cst_44 = arith.constant dense<0xFF800000> : vector<16xf32>
    %102 = vector.multi_reduction <maximumf>, %101, %cst_44 [1] : vector<16x16xf32> to vector<16xf32>
    %103 = vector.shape_cast %102 : vector<16xf32> to vector<16x1xf32>
    %104 = vector.broadcast %103 : vector<16x1xf32> to vector<16x16xf32>
    %105 = arith.subf %101, %104 : vector<16x16xf32>
    %106 = math.exp %105 : vector<16x16xf32>
    %cst_45 = arith.constant dense<0.000000e+00> : vector<16xf32>
    %107 = vector.multi_reduction <add>, %106, %cst_45 [1] : vector<16x16xf32> to vector<16xf32>
    %108 = vector.shape_cast %107 : vector<16xf32> to vector<16x1xf32>
    %109 = tpu.reciprocal %108 {approx = true} : vector<16x1xf32> -> vector<16x1xf32>
    %110 = vector.broadcast %109 : vector<16x1xf32> to vector<16x16xf32>
    %111 = arith.mulf %106, %110 : vector<16x16xf32>
    %112 = arith.truncf %111 : vector<16x16xf32> to vector<16x16xbf16>
    %cst_46 = arith.constant dense<0.000000e+00> : vector<16x16xf32>
    %113 = tpu.matmul %112, %98, %cst_46 {dimension_numbers = #tpu.dot_dimension_numbers<[1], [0], [0], [1], [0, 0, 1, 1], [], []>} : vector<16x16xbf16>, vector<16x16xbf16>, vector<16x16xf32> -> vector<16x16xf32>
    %114 = vector.extract_strided_slice %21 {offsets = [0, 80], sizes = [16, 16], strides = [1, 1]} : vector<16x128xbf16> to vector<16x16xbf16>
    %115 = vector.extract_strided_slice %22 {offsets = [0, 80], sizes = [16, 16], strides = [1, 1]} : vector<16x128xbf16> to vector<16x16xbf16>
    %116 = vector.extract_strided_slice %23 {offsets = [0, 80], sizes = [16, 16], strides = [1, 1]} : vector<16x128xbf16> to vector<16x16xbf16>
    %cst_47 = arith.constant dense<0.000000e+00> : vector<16x16xf32>
    %117 = tpu.matmul %114, %115, %cst_47 {dimension_numbers = #tpu.dot_dimension_numbers<[1], [1], [0], [0], [0, 0, 1, 0], [], []>} : vector<16x16xbf16>, vector<16x16xbf16>, vector<16x16xf32> -> vector<16x16xf32>
    %cst_48 = arith.constant 2.500000e-01 : f32
    %118 = vector.broadcast %cst_48 : f32 to vector<16x16xf32>
    %119 = arith.mulf %117, %118 : vector<16x16xf32>
    %cst_49 = arith.constant dense<0xFF800000> : vector<16xf32>
    %120 = vector.multi_reduction <maximumf>, %119, %cst_49 [1] : vector<16x16xf32> to vector<16xf32>
    %121 = vector.shape_cast %120 : vector<16xf32> to vector<16x1xf32>
    %122 = vector.broadcast %121 : vector<16x1xf32> to vector<16x16xf32>
    %123 = arith.subf %119, %122 : vector<16x16xf32>
    %124 = math.exp %123 : vector<16x16xf32>
    %cst_50 = arith.constant dense<0.000000e+00> : vector<16xf32>
    %125 = vector.multi_reduction <add>, %124, %cst_50 [1] : vector<16x16xf32> to vector<16xf32>
    %126 = vector.shape_cast %125 : vector<16xf32> to vector<16x1xf32>
    %127 = tpu.reciprocal %126 {approx = true} : vector<16x1xf32> -> vector<16x1xf32>
    %128 = vector.broadcast %127 : vector<16x1xf32> to vector<16x16xf32>
    %129 = arith.mulf %124, %128 : vector<16x16xf32>
    %130 = arith.truncf %129 : vector<16x16xf32> to vector<16x16xbf16>
    %cst_51 = arith.constant dense<0.000000e+00> : vector<16x16xf32>
    %131 = tpu.matmul %130, %116, %cst_51 {dimension_numbers = #tpu.dot_dimension_numbers<[1], [0], [0], [1], [0, 0, 1, 1], [], []>} : vector<16x16xbf16>, vector<16x16xbf16>, vector<16x16xf32> -> vector<16x16xf32>
    %132 = vector.extract_strided_slice %21 {offsets = [0, 96], sizes = [16, 16], strides = [1, 1]} : vector<16x128xbf16> to vector<16x16xbf16>
    %133 = vector.extract_strided_slice %22 {offsets = [0, 96], sizes = [16, 16], strides = [1, 1]} : vector<16x128xbf16> to vector<16x16xbf16>
    %134 = vector.extract_strided_slice %23 {offsets = [0, 96], sizes = [16, 16], strides = [1, 1]} : vector<16x128xbf16> to vector<16x16xbf16>
    %cst_52 = arith.constant dense<0.000000e+00> : vector<16x16xf32>
    %135 = tpu.matmul %132, %133, %cst_52 {dimension_numbers = #tpu.dot_dimension_numbers<[1], [1], [0], [0], [0, 0, 1, 0], [], []>} : vector<16x16xbf16>, vector<16x16xbf16>, vector<16x16xf32> -> vector<16x16xf32>
    %cst_53 = arith.constant 2.500000e-01 : f32
    %136 = vector.broadcast %cst_53 : f32 to vector<16x16xf32>
    %137 = arith.mulf %135, %136 : vector<16x16xf32>
    %cst_54 = arith.constant dense<0xFF800000> : vector<16xf32>
    %138 = vector.multi_reduction <maximumf>, %137, %cst_54 [1] : vector<16x16xf32> to vector<16xf32>
    %139 = vector.shape_cast %138 : vector<16xf32> to vector<16x1xf32>
    %140 = vector.broadcast %139 : vector<16x1xf32> to vector<16x16xf32>
    %141 = arith.subf %137, %140 : vector<16x16xf32>
    %142 = math.exp %141 : vector<16x16xf32>
    %cst_55 = arith.constant dense<0.000000e+00> : vector<16xf32>
    %143 = vector.multi_reduction <add>, %142, %cst_55 [1] : vector<16x16xf32> to vector<16xf32>
    %144 = vector.shape_cast %143 : vector<16xf32> to vector<16x1xf32>
    %145 = tpu.reciprocal %144 {approx = true} : vector<16x1xf32> -> vector<16x1xf32>
    %146 = vector.broadcast %145 : vector<16x1xf32> to vector<16x16xf32>
    %147 = arith.mulf %142, %146 : vector<16x16xf32>
    %148 = arith.truncf %147 : vector<16x16xf32> to vector<16x16xbf16>
    %cst_56 = arith.constant dense<0.000000e+00> : vector<16x16xf32>
    %149 = tpu.matmul %148, %134, %cst_56 {dimension_numbers = #tpu.dot_dimension_numbers<[1], [0], [0], [1], [0, 0, 1, 1], [], []>} : vector<16x16xbf16>, vector<16x16xbf16>, vector<16x16xf32> -> vector<16x16xf32>
    %150 = vector.extract_strided_slice %21 {offsets = [0, 112], sizes = [16, 16], strides = [1, 1]} : vector<16x128xbf16> to vector<16x16xbf16>
    %151 = vector.extract_strided_slice %22 {offsets = [0, 112], sizes = [16, 16], strides = [1, 1]} : vector<16x128xbf16> to vector<16x16xbf16>
    %152 = vector.extract_strided_slice %23 {offsets = [0, 112], sizes = [16, 16], strides = [1, 1]} : vector<16x128xbf16> to vector<16x16xbf16>
    %cst_57 = arith.constant dense<0.000000e+00> : vector<16x16xf32>
    %153 = tpu.matmul %150, %151, %cst_57 {dimension_numbers = #tpu.dot_dimension_numbers<[1], [1], [0], [0], [0, 0, 1, 0], [], []>} : vector<16x16xbf16>, vector<16x16xbf16>, vector<16x16xf32> -> vector<16x16xf32>
    %cst_58 = arith.constant 2.500000e-01 : f32
    %154 = vector.broadcast %cst_58 : f32 to vector<16x16xf32>
    %155 = arith.mulf %153, %154 : vector<16x16xf32>
    %cst_59 = arith.constant dense<0xFF800000> : vector<16xf32>
    %156 = vector.multi_reduction <maximumf>, %155, %cst_59 [1] : vector<16x16xf32> to vector<16xf32>
    %157 = vector.shape_cast %156 : vector<16xf32> to vector<16x1xf32>
    %158 = vector.broadcast %157 : vector<16x1xf32> to vector<16x16xf32>
    %159 = arith.subf %155, %158 : vector<16x16xf32>
    %160 = math.exp %159 : vector<16x16xf32>
    %cst_60 = arith.constant dense<0.000000e+00> : vector<16xf32>
    %161 = vector.multi_reduction <add>, %160, %cst_60 [1] : vector<16x16xf32> to vector<16xf32>
    %162 = vector.shape_cast %161 : vector<16xf32> to vector<16x1xf32>
    %163 = tpu.reciprocal %162 {approx = true} : vector<16x1xf32> -> vector<16x1xf32>
    %164 = vector.broadcast %163 : vector<16x1xf32> to vector<16x16xf32>
    %165 = arith.mulf %160, %164 : vector<16x16xf32>
    %166 = arith.truncf %165 : vector<16x16xf32> to vector<16x16xbf16>
    %cst_61 = arith.constant dense<0.000000e+00> : vector<16x16xf32>
    %167 = tpu.matmul %166, %152, %cst_61 {dimension_numbers = #tpu.dot_dimension_numbers<[1], [0], [0], [1], [0, 0, 1, 1], [], []>} : vector<16x16xbf16>, vector<16x16xbf16>, vector<16x16xf32> -> vector<16x16xf32>
    %168 = tpu.concatenate %41, %59, %77, %95, %113, %131, %149, %167 in 1 : vector<16x16xf32>, vector<16x16xf32>, vector<16x16xf32>, vector<16x16xf32>, vector<16x16xf32>, vector<16x16xf32>, vector<16x16xf32>, vector<16x16xf32> -> vector<16x128xf32>
    %169 = arith.truncf %168 : vector<16x128xf32> to vector<16x128xbf16>
    %c0_62 = arith.constant 0 : index
    %c0_63 = arith.constant 0 : index
    %170 = vector.load %arg7[%c0_62, %c0_63] : memref<128x128xbf16, #tpu.memory_space<vmem>>, vector<128x128xbf16>
    %cst_64 = arith.constant dense<0.000000e+00> : vector<16x128xf32>
    %171 = tpu.matmul %169, %170, %cst_64 {dimension_numbers = #tpu.dot_dimension_numbers<[1], [0], [0], [1], [0, 0, 1, 1], [], []>} : vector<16x128xbf16>, vector<128x128xbf16>, vector<16x128xf32> -> vector<16x128xf32>
    %c0_65 = arith.constant 0 : index
    %c0_66 = arith.constant 0 : index
    %172 = vector.load %arg11[%c0_65, %c0_66] : memref<1x128xf32, #tpu.memory_space<vmem>>, vector<1x128xf32>
    %173 = vector.broadcast %172 : vector<1x128xf32> to vector<16x128xf32>
    %174 = arith.addf %171, %173 : vector<16x128xf32>
    %c0_67 = arith.constant 0 : index
    %c0_68 = arith.constant 0 : index
    %c0_69 = arith.constant 0 : index
    %175 = vector.load %arg12[%c0_67, %c0_68, %c0_69] : memref<1x16x128xf32, #tpu.memory_space<vmem>>, vector<1x16x128xf32>
    %176 = vector.shape_cast %175 : vector<1x16x128xf32> to vector<16x128xf32>
    %177 = vector.shape_cast %174 : vector<16x128xf32> to vector<1x16x128xf32>
    tpu.vector_store %arg12[%c0_67, %c0_68, %c0_69], %177 {strides = array<i32>} : memref<1x16x128xf32, #tpu.memory_space<vmem>>, vector<1x16x128xf32>,
    return
  }
  func.func @transform_0(%arg0: i32) -> (i32, i32, i32) {
    %c0_i32 = arith.constant 0 : i32
    %c0_i32_0 = arith.constant 0 : i32
    %c0_i32_1 = arith.constant 0 : i32
    return %arg0, %c0_i32, %c0_i32_0 : i32, i32, i32
  }
  func.func @transform_1(%arg0: i32) -> (i32, i32, i32) {
    %c0_i32 = arith.constant 0 : i32
    %c0_i32_0 = arith.constant 0 : i32
    %c0_i32_1 = arith.constant 0 : i32
    return %arg0, %c0_i32, %c0_i32_0 : i32, i32, i32
  }
  func.func @transform_2(%arg0: i32) -> (i32, i32, i32) {
    %c0_i32 = arith.constant 0 : i32
    %c0_i32_0 = arith.constant 0 : i32
    %c0_i32_1 = arith.constant 0 : i32
    return %arg0, %c0_i32, %c0_i32_0 : i32, i32, i32
  }
  func.func @transform_3(%arg0: i32) -> (i32, i32) {
    %c0_i32 = arith.constant 0 : i32
    %c0_i32_0 = arith.constant 0 : i32
    %c0_i32_1 = arith.constant 0 : i32
    return %c0_i32, %c0_i32_0 : i32, i32
  }
  func.func @transform_4(%arg0: i32) -> (i32, i32) {
    %c0_i32 = arith.constant 0 : i32
    %c0_i32_0 = arith.constant 0 : i32
    %c0_i32_1 = arith.constant 0 : i32
    return %c0_i32, %c0_i32_0 : i32, i32
  }
  func.func @transform_5(%arg0: i32) -> (i32, i32) {
    %c0_i32 = arith.constant 0 : i32
    %c0_i32_0 = arith.constant 0 : i32
    %c0_i32_1 = arith.constant 0 : i32
    return %c0_i32, %c0_i32_0 : i32, i32
  }
  func.func @transform_6(%arg0: i32) -> (i32, i32) {
    %c0_i32 = arith.constant 0 : i32
    %c0_i32_0 = arith.constant 0 : i32
    %c0_i32_1 = arith.constant 0 : i32
    return %c0_i32, %c0_i32_0 : i32, i32
  }
  func.func @transform_7(%arg0: i32) -> (i32, i32) {
    %c0_i32 = arith.constant 0 : i32
    %c0_i32_0 = arith.constant 0 : i32
    %c0_i32_1 = arith.constant 0 : i32
    return %c0_i32, %c0_i32_0 : i32, i32
  }
  func.func @transform_8(%arg0: i32) -> (i32, i32) {
    %c0_i32 = arith.constant 0 : i32
    %c0_i32_0 = arith.constant 0 : i32
    %c0_i32_1 = arith.constant 0 : i32
    return %c0_i32, %c0_i32_0 : i32, i32
  }
  func.func @transform_9(%arg0: i32) -> (i32, i32) {
    %c0_i32 = arith.constant 0 : i32
    %c0_i32_0 = arith.constant 0 : i32
    %c0_i32_1 = arith.constant 0 : i32
    return %c0_i32, %c0_i32_0 : i32, i32
  }
  func.func @transform_10(%arg0: i32) -> (i32, i32) {
    %c0_i32 = arith.constant 0 : i32
    %c0_i32_0 = arith.constant 0 : i32
    %c0_i32_1 = arith.constant 0 : i32
    return %c0_i32, %c0_i32_0 : i32, i32
  }
  func.func @transform_11(%arg0: i32) -> (i32, i32, i32) {
    %c0_i32 = arith.constant 0 : i32
    %c0_i32_0 = arith.constant 0 : i32
    %c0_i32_1 = arith.constant 0 : i32
    return %arg0, %c0_i32, %c0_i32_0 : i32, i32, i32
  }
}

</mosaic_0001>

<llo_original>
// kernel: tpu_custom_call.1
$region0: #{tpu_custom_call.1}
  #allocation0 [shape = 'u32[]', space=smem, size = 0x4, offset = 0x4, fixed_abs, tag = 'smem constant byte address 0x4 - core index']
  #allocation1 [shape = 'u32[144,128]{1,0:T(1,128)}', space=vmem, size = 0x12000, scoped, tag = 'internal scratch']
  %s0 = inlined_call_operand.hbm [shape: bf16[2,16,128], index: 0, kind: input, shape index: {}]
  %s1 = inlined_call_operand.hbm [shape: bf16[2,16,128], index: 1, kind: input, shape index: {}]
  %s2 = inlined_call_operand.hbm [shape: bf16[2,16,128], index: 2, kind: input, shape index: {}]
  %s3 = inlined_call_operand.hbm [shape: bf16[128,128], index: 3, kind: input, shape index: {}]
  %s4 = inlined_call_operand.hbm [shape: bf16[128,128], index: 4, kind: input, shape index: {}]
  %s5 = inlined_call_operand.hbm [shape: bf16[128,128], index: 5, kind: input, shape index: {}]
  %s6 = inlined_call_operand.hbm [shape: bf16[128,128], index: 6, kind: input, shape index: {}]
  %s7 = inlined_call_operand.vmem [shape: f32[1,128], index: 7, kind: input, shape index: {}]
  %s8 = inlined_call_operand.vmem [shape: f32[1,128], index: 8, kind: input, shape index: {}]
  %s9 = inlined_call_operand.vmem [shape: f32[1,128], index: 9, kind: input, shape index: {}]
  %s10 = inlined_call_operand.vmem [shape: f32[1,128], index: 10, kind: input, shape index: {}]
  %s11 = inlined_call_operand.hbm [shape: f32[2,16,128], index: 11, kind: output, shape index: {}]
  %s12 = sld [smem:[#allocation0]]
  $region105: #{tpu_custom_call.1} parent=0
    _
  %s14 = ssub.s32 1, %s12
  %s15 = scalar_select 0, %s14, %s12
  $region1: #{tpu_custom_call.1} parent=0
    #allocation2 [shape = 'u8[8192]{0}', space=vmem, size = 0x2000, scoped, tag = 'input window, operand 0']
    #allocation3 [shape = 's32[2]{0}', space=sflag, size = 0x8, scoped, tag = 'scoped memory for tpu_custom_call.1']
    #allocation4 [shape = 's32[2]{0}', space=sflag, size = 0x8, scoped, tag = 'scoped memory for tpu_custom_call.1']
    #allocation5 [shape = 'u8[8192]{0}', space=vmem, size = 0x2000, scoped, tag = 'input window, operand 1']
    #allocation6 [shape = 's32[2]{0}', space=sflag, size = 0x8, scoped, tag = 'scoped memory for tpu_custom_call.1']
    #allocation7 [shape = 'u8[8192]{0}', space=vmem, size = 0x2000, scoped, tag = 'input window, operand 2']
    #allocation8 [shape = 'u8[32768]{0}', space=vmem, size = 0x8000, scoped, tag = 'input window, operand 3, single buffered']
    #allocation9 [shape = 's32[1]{0}', space=sflag, size = 0x4, scoped, tag = 'scoped memory for tpu_custom_call.1']
    #allocation10 [shape = 'u8[32768]{0}', space=vmem, size = 0x8000, scoped, tag = 'input window, operand 4, single buffered']
    #allocation11 [shape = 'u8[32768]{0}', space=vmem, size = 0x8000, scoped, tag = 'input window, operand 5, single buffered']
    #allocation12 [shape = 's32[1]{0}', space=sflag, size = 0x4, scoped, tag = 'scoped memory for tpu_custom_call.1']
    #allocation13 [shape = 'u8[32768]{0}', space=vmem, size = 0x8000, scoped, tag = 'input window, operand 6, single buffered']
    #allocation14 [shape = 'u8[16384]{0}', space=vmem, size = 0x4000, scoped, tag = 'output window, operand 0']
    %16 = vsyncpa [#allocation3], 0
    %s17 = scalar_lea.sflag [#allocation3], 1
    %18 = vsyncpa %s17, 0
    %19 = vsyncpa [#allocation6], 0
    %s20 = scalar_lea.sflag [#allocation6], 1
    %21 = vsyncpa %s20, 0
    %22 = vsyncpa [#allocation9], 0
    %23 = vsyncpa [#allocation12], 0
    %24 = vsyncpa [#allocation4], 0
    %s25 = scalar_lea.sflag [#allocation4], 1
    %26 = vsyncpa %s25, 0
    loop: start=0, step=1, limit=4
    $region2: #{tpu_custom_call.1} parent=1 // loop_pre_header
      _
    $region3: #{tpu_custom_call.1} parent=1 // loop_header
      %s28 = sphi 0, %s32
      %p29 = scmp.ge.s32.totalorder %s28, 4
      %s38 = sphi 0, %s40
      %s41 = sphi 0, %s38
      %s42 = sphi 0, %s41
      %s58 = sphi 0, %s42
      %s64 = sphi 0, %s66
      %s67 = sphi 0, %s64
      %s68 = sphi 0, %s67
      %s84 = sphi 0, %s68
      %s90 = sphi 0, %s92
      %s93 = sphi 0, %s90
      %s94 = sphi 0, %s93
      %s110 = sphi 0, %s94
      %s114 = sphi 0, %s114
      %s116 = sphi 0, %s114
      %s117 = sphi 0, %s116
      %s131 = sphi 0, %s117
      %s135 = sphi 0, %s135
      %s137 = sphi 0, %s135
      %s138 = sphi 0, %s137
      %s152 = sphi 0, %s138
      %s156 = sphi 0, %s156
      %s158 = sphi 0, %s156
      %s159 = sphi 0, %s158
      %s173 = sphi 0, %s159
      %s177 = sphi 0, %s177
      %s179 = sphi 0, %s177
      %s180 = sphi 0, %s179
      %s194 = sphi 0, %s180
      %s198 = sphi 0, %s198
      %s200 = sphi 0, %s198
      %s201 = sphi 0, %s200
      %s215 = sphi 0, %s201
      %s219 = sphi 0, %s219
      %s221 = sphi 0, %s219
      %s222 = sphi 0, %s221
      %s236 = sphi 0, %s222
      %s240 = sphi 0, %s240
      %s242 = sphi 0, %s240
      %s243 = sphi 0, %s242
      %s257 = sphi 0, %s243
      %s261 = sphi 0, %s261
      %s263 = sphi 0, %s261
      %s264 = sphi 0, %s263
      %s278 = sphi 0, %s264
      %s284 = sphi 0, %s286
      %s287 = sphi 0, %s284
      %s288 = sphi 0, %s287
      %s304 = sphi 0, %s288
    $region4: #{tpu_custom_call.1} parent=1 // loop_header_branch
      %31 = sbr.rel (%p29) target = $region8
    $region5: #{tpu_custom_call.1} parent=1 // loop_body
      %s33 = ssub.s32 %s28, 1
      %s34 = ssub.s32 %s28, 2
      %s35 = sadd.s32 %s28, 1
      %s36 = ssub.s32 %s28, %s35
      %p37 = scmp.eq.s32.totalorder %s36, 0
      %s39 = sadd.s32 %s38, 1
      %s40 = scalar_select %p37, %s38, %s39
      %p43 = pneg %p37
      %p44 = scmp.eq.s32.totalorder %s28, 1
      %p45 = por %p43, %p44
      %p46 = scmp.ne.s32.totalorder %s38, %s41
      %p47 = scmp.eq.s32.totalorder %s28, 0
      %p48 = por %p46, %p47
      %p49 = scmp.ne.s32.totalorder %s38, %s41
      %p50 = scmp.eq.s32.totalorder %s33, 1
      %p51 = por %p49, %p50
      %p52 = scmp.ne.s32.totalorder %s41, %s42
      %p53 = scmp.eq.s32.totalorder %s33, 0
      %p54 = por %p52, %p53
      %p55 = scmp.ne.s32.totalorder %s41, %s42
      %p56 = scmp.eq.s32.totalorder %s34, 1
      %p57 = por %p55, %p56
      %p59 = scmp.ne.s32.totalorder %s42, %s58
      %p60 = scmp.eq.s32.totalorder %s34, 0
      %p61 = por %p59, %p60
      %s62 = ssub.s32 %s28, %s35
      %p63 = scmp.eq.s32.totalorder %s62, 0
      %s65 = sadd.s32 %s64, 1
      %s66 = scalar_select %p63, %s64, %s65
      %p69 = pneg %p63
      %p70 = scmp.eq.s32.totalorder %s28, 1
      %p71 = por %p69, %p70
      %p72 = scmp.ne.s32.totalorder %s64, %s67
      %p73 = scmp.eq.s32.totalorder %s28, 0
      %p74 = por %p72, %p73
      %p75 = scmp.ne.s32.totalorder %s64, %s67
      %p76 = scmp.eq.s32.totalorder %s33, 1
      %p77 = por %p75, %p76
      %p78 = scmp.ne.s32.totalorder %s67, %s68
      %p79 = scmp.eq.s32.totalorder %s33, 0
      %p80 = por %p78, %p79
      %p81 = scmp.ne.s32.totalorder %s67, %s68
      %p82 = scmp.eq.s32.totalorder %s34, 1
      %p83 = por %p81, %p82
      %p85 = scmp.ne.s32.totalorder %s68, %s84
      %p86 = scmp.eq.s32.totalorder %s34, 0
      %p87 = por %p85, %p86
      %s88 = ssub.s32 %s28, %s35
      %p89 = scmp.eq.s32.totalorder %s88, 0
      %s91 = sadd.s32 %s90, 1
      %s92 = scalar_select %p89, %s90, %s91
      %p95 = pneg %p89
      %p96 = scmp.eq.s32.totalorder %s28, 1
      %p97 = por %p95, %p96
      %p98 = scmp.ne.s32.totalorder %s90, %s93
      %p99 = scmp.eq.s32.totalorder %s28, 0
      %p100 = por %p98, %p99
      %p101 = scmp.ne.s32.totalorder %s90, %s93
      %p102 = scmp.eq.s32.totalorder %s33, 1
      %p103 = por %p101, %p102
      %p104 = scmp.ne.s32.totalorder %s93, %s94
      %p105 = scmp.eq.s32.totalorder %s33, 0
      %p106 = por %p104, %p105
      %p107 = scmp.ne.s32.totalorder %s93, %s94
      %p108 = scmp.eq.s32.totalorder %s34, 1
      %p109 = por %p107, %p108
      %p111 = scmp.ne.s32.totalorder %s94, %s110
      %p112 = scmp.eq.s32.totalorder %s34, 0
      %p113 = por %p111, %p112
      %s115 = sadd.s32 %s114, 1
      %p118 = scmp.eq.s32.totalorder %s28, 1
      %p119 = scmp.ne.s32.totalorder %s114, %s116
      %p120 = scmp.eq.s32.totalorder %s28, 0
      %p121 = por %p119, %p120
      %p122 = scmp.ne.s32.totalorder %s114, %s116
      %p123 = scmp.eq.s32.totalorder %s33, 1
      %p124 = por %p122, %p123
      %p125 = scmp.ne.s32.totalorder %s116, %s117
      %p126 = scmp.eq.s32.totalorder %s33, 0
      %p127 = por %p125, %p126
      %p128 = scmp.ne.s32.totalorder %s116, %s117
      %p129 = scmp.eq.s32.totalorder %s34, 1
      %p130 = por %p128, %p129
      %p132 = scmp.ne.s32.totalorder %s117, %s131
      %p133 = scmp.eq.s32.totalorder %s34, 0
      %p134 = por %p132, %p133
      %s136 = sadd.s32 %s135, 1
      %p139 = scmp.eq.s32.totalorder %s28, 1
      %p140 = scmp.ne.s32.totalorder %s135, %s137
      %p141 = scmp.eq.s32.totalorder %s28, 0
      %p142 = por %p140, %p141
      %p143 = scmp.ne.s32.totalorder %s135, %s137
      %p144 = scmp.eq.s32.totalorder %s33, 1
      %p145 = por %p143, %p144
      %p146 = scmp.ne.s32.totalorder %s137, %s138
      %p147 = scmp.eq.s32.totalorder %s33, 0
      %p148 = por %p146, %p147
      %p149 = scmp.ne.s32.totalorder %s137, %s138
      %p150 = scmp.eq.s32.totalorder %s34, 1
      %p151 = por %p149, %p150
      %p153 = scmp.ne.s32.totalorder %s138, %s152
      %p154 = scmp.eq.s32.totalorder %s34, 0
      %p155 = por %p153, %p154
      %s157 = sadd.s32 %s156, 1
      %p160 = scmp.eq.s32.totalorder %s28, 1
      %p161 = scmp.ne.s32.totalorder %s156, %s158
      %p162 = scmp.eq.s32.totalorder %s28, 0
      %p163 = por %p161, %p162
      %p164 = scmp.ne.s32.totalorder %s156, %s158
      %p165 = scmp.eq.s32.totalorder %s33, 1
      %p166 = por %p164, %p165
      %p167 = scmp.ne.s32.totalorder %s158, %s159
      %p168 = scmp.eq.s32.totalorder %s33, 0
      %p169 = por %p167, %p168
      %p170 = scmp.ne.s32.totalorder %s158, %s159
      %p171 = scmp.eq.s32.totalorder %s34, 1
      %p172 = por %p170, %p171
      %p174 = scmp.ne.s32.totalorder %s159, %s173
      %p175 = scmp.eq.s32.totalorder %s34, 0
      %p176 = por %p174, %p175
      %s178 = sadd.s32 %s177, 1
      %p181 = scmp.eq.s32.totalorder %s28, 1
      %p182 = scmp.ne.s32.totalorder %s177, %s179
      %p183 = scmp.eq.s32.totalorder %s28, 0
      %p184 = por %p182, %p183
      %p185 = scmp.ne.s32.totalorder %s177, %s179
      %p186 = scmp.eq.s32.totalorder %s33, 1
      %p187 = por %p185, %p186
      %p188 = scmp.ne.s32.totalorder %s179, %s180
      %p189 = scmp.eq.s32.totalorder %s33, 0
      %p190 = por %p188, %p189
      %p191 = scmp.ne.s32.totalorder %s179, %s180
      %p192 = scmp.eq.s32.totalorder %s34, 1
      %p193 = por %p191, %p192
      %p195 = scmp.ne.s32.totalorder %s180, %s194
      %p196 = scmp.eq.s32.totalorder %s34, 0
      %p197 = por %p195, %p196
      %s199 = sadd.s32 %s198, 1
      %p202 = scmp.eq.s32.totalorder %s28, 1
      %p203 = scmp.ne.s32.totalorder %s198, %s200
      %p204 = scmp.eq.s32.totalorder %s28, 0
      %p205 = por %p203, %p204
      %p206 = scmp.ne.s32.totalorder %s198, %s200
      %p207 = scmp.eq.s32.totalorder %s33, 1
      %p208 = por %p206, %p207
      %p209 = scmp.ne.s32.totalorder %s200, %s201
      %p210 = scmp.eq.s32.totalorder %s33, 0
      %p211 = por %p209, %p210
      %p212 = scmp.ne.s32.totalorder %s200, %s201
      %p213 = scmp.eq.s32.totalorder %s34, 1
      %p214 = por %p212, %p213
      %p216 = scmp.ne.s32.totalorder %s201, %s215
      %p217 = scmp.eq.s32.totalorder %s34, 0
      %p218 = por %p216, %p217
      %s220 = sadd.s32 %s219, 1
      %p223 = scmp.eq.s32.totalorder %s28, 1
      %p224 = scmp.ne.s32.totalorder %s219, %s221
      %p225 = scmp.eq.s32.totalorder %s28, 0
      %p226 = por %p224, %p225
      %p227 = scmp.ne.s32.totalorder %s219, %s221
      %p228 = scmp.eq.s32.totalorder %s33, 1
      %p229 = por %p227, %p228
      %p230 = scmp.ne.s32.totalorder %s221, %s222
      %p231 = scmp.eq.s32.totalorder %s33, 0
      %p232 = por %p230, %p231
      %p233 = scmp.ne.s32.totalorder %s221, %s222
      %p234 = scmp.eq.s32.totalorder %s34, 1
      %p235 = por %p233, %p234
      %p237 = scmp.ne.s32.totalorder %s222, %s236
      %p238 = scmp.eq.s32.totalorder %s34, 0
      %p239 = por %p237, %p238
      %s241 = sadd.s32 %s240, 1
      %p244 = scmp.eq.s32.totalorder %s28, 1
      %p245 = scmp.ne.s32.totalorder %s240, %s242
      %p246 = scmp.eq.s32.totalorder %s28, 0
      %p247 = por %p245, %p246
      %p248 = scmp.ne.s32.totalorder %s240, %s242
      %p249 = scmp.eq.s32.totalorder %s33, 1
      %p250 = por %p248, %p249
      %p251 = scmp.ne.s32.totalorder %s242, %s243
      %p252 = scmp.eq.s32.totalorder %s33, 0
      %p253 = por %p251, %p252
      %p254 = scmp.ne.s32.totalorder %s242, %s243
      %p255 = scmp.eq.s32.totalorder %s34, 1
      %p256 = por %p254, %p255
      %p258 = scmp.ne.s32.totalorder %s243, %s257
      %p259 = scmp.eq.s32.totalorder %s34, 0
      %p260 = por %p258, %p259
      %s262 = sadd.s32 %s261, 1
      %p265 = scmp.eq.s32.totalorder %s28, 1
      %p266 = scmp.ne.s32.totalorder %s261, %s263
      %p267 = scmp.eq.s32.totalorder %s28, 0
      %p268 = por %p266, %p267
      %p269 = scmp.ne.s32.totalorder %s261, %s263
      %p270 = scmp.eq.s32.totalorder %s33, 1
      %p271 = por %p269, %p270
      %p272 = scmp.ne.s32.totalorder %s263, %s264
      %p273 = scmp.eq.s32.totalorder %s33, 0
      %p274 = por %p272, %p273
      %p275 = scmp.ne.s32.totalorder %s263, %s264
      %p276 = scmp.eq.s32.totalorder %s34, 1
      %p277 = por %p275, %p276
      %p279 = scmp.ne.s32.totalorder %s264, %s278
      %p280 = scmp.eq.s32.totalorder %s34, 0
      %p281 = por %p279, %p280
      %s282 = ssub.s32 %s28, %s35
      %p283 = scmp.eq.s32.totalorder %s282, 0
      %s285 = sadd.s32 %s284, 1
      %s286 = scalar_select %p283, %s284, %s285
      %p289 = pneg %p283
      %p290 = scmp.eq.s32.totalorder %s28, 1
      %p291 = por %p289, %p290
      %p292 = scmp.ne.s32.totalorder %s284, %s287
      %p293 = scmp.eq.s32.totalorder %s28, 0
      %p294 = por %p292, %p293
      %p295 = scmp.ne.s32.totalorder %s284, %s287
      %p296 = scmp.eq.s32.totalorder %s33, 1
      %p297 = por %p295, %p296
      %p298 = scmp.ne.s32.totalorder %s287, %s288
      %p299 = scmp.eq.s32.totalorder %s33, 0
      %p300 = por %p298, %p299
      %p301 = scmp.ne.s32.totalorder %s287, %s288
      %p302 = scmp.eq.s32.totalorder %s34, 1
      %p303 = por %p301, %p302
      %p305 = scmp.ne.s32.totalorder %s288, %s304
      %p306 = scmp.eq.s32.totalorder %s34, 0
      %p307 = por %p305, %p306
      %p308 = scmp.le.s32.totalorder 1, %s28
      %p309 = scmp.lt.s32.totalorder %s28, 3
      %p310 = pnand %p308, %p309
      %p311 = pneg %p310
      // Predicated region
      $region9: #{tpu_custom_call.1} parent=5 // pred_check
        _
      $region10: #{tpu_custom_call.1} parent=5 // pred_check_branch
        %313 = sbr.rel (%p310) target = $region12
      $region11: #{tpu_custom_call.1} parent=5 // pred_region
        %s314 = ssub.s32 %s28, 1
        // Predicated region
        $region13: #{tpu_custom_call.1} parent=11 // pred_check
          %p315 = pneg %p127
        $region14: #{tpu_custom_call.1} parent=11 // pred_check_branch
          %317 = sbr.rel (%p315) target = $region16
        $region15: #{tpu_custom_call.1} parent=11 // pred_region
          %s319 = ssub.s32 1024, 1024
          %320 = vsyncadd [#allocation9], %s319
          %s321 = sshll.u32 [#allocation8], 4
          %s322 = int_to_ptr.vmem [resolvable:$true] %s321
          %327 = dma.hbm_to_vmem [thread:$0]  %s3, 1024, %s322, [#allocation9], 64, 64, 4
        $region16: #{tpu_custom_call.1} parent=11 // pred_fallthru
          _
        // Predicated region
        $region17: #{tpu_custom_call.1} parent=11 // pred_check
          %p328 = pneg %p148
        $region18: #{tpu_custom_call.1} parent=11 // pred_check_branch
          %330 = sbr.rel (%p328) target = $region20
        $region19: #{tpu_custom_call.1} parent=11 // pred_region
          %s332 = ssub.s32 1024, 1024
          %333 = vsyncadd [#allocation9], %s332
          %s334 = sshll.u32 [#allocation10], 4
          %s335 = int_to_ptr.vmem [resolvable:$true] %s334
          %340 = dma.hbm_to_vmem [thread:$0]  %s4, 1024, %s335, [#allocation9], 64, 64, 4
        $region20: #{tpu_custom_call.1} parent=11 // pred_fallthru
          _
        // Predicated region
        $region21: #{tpu_custom_call.1} parent=11 // pred_check
          %p341 = pneg %p169
        $region22: #{tpu_custom_call.1} parent=11 // pred_check_branch
          %343 = sbr.rel (%p341) target = $region24
        $region23: #{tpu_custom_call.1} parent=11 // pred_region
          %s345 = ssub.s32 1024, 1024
          %346 = vsyncadd [#allocation12], %s345
          %s347 = sshll.u32 [#allocation11], 4
          %s348 = int_to_ptr.vmem [resolvable:$true] %s347
          %353 = dma.hbm_to_vmem [thread:$0]  %s5, 1024, %s348, [#allocation12], 64, 64, 4
        $region24: #{tpu_custom_call.1} parent=11 // pred_fallthru
          _
        // Predicated region
        $region25: #{tpu_custom_call.1} parent=11 // pred_check
          %p354 = pneg %p190
        $region26: #{tpu_custom_call.1} parent=11 // pred_check_branch
          %356 = sbr.rel (%p354) target = $region28
        $region27: #{tpu_custom_call.1} parent=11 // pred_region
          %s358 = ssub.s32 1024, 1024
          %359 = vsyncadd [#allocation12], %s358
          %s360 = sshll.u32 [#allocation13], 4
          %s361 = int_to_ptr.vmem [resolvable:$true] %s360
          %366 = dma.hbm_to_vmem [thread:$0]  %s6, 1024, %s361, [#allocation12], 64, 64, 4
        $region28: #{tpu_custom_call.1} parent=11 // pred_fallthru
          _
        // Predicated region
        $region29: #{tpu_custom_call.1} parent=11 // pred_check
          %p367 = pneg %p211
        $region30: #{tpu_custom_call.1} parent=11 // pred_check_branch
          %369 = sbr.rel (%p367) target = $region32
        $region31: #{tpu_custom_call.1} parent=11 // pred_region
          _
        $region32: #{tpu_custom_call.1} parent=11 // pred_fallthru
          _
        // Predicated region
        $region33: #{tpu_custom_call.1} parent=11 // pred_check
          %p370 = pneg %p232
        $region34: #{tpu_custom_call.1} parent=11 // pred_check_branch
          %372 = sbr.rel (%p370) target = $region36
        $region35: #{tpu_custom_call.1} parent=11 // pred_region
          _
        $region36: #{tpu_custom_call.1} parent=11 // pred_fallthru
          _
        // Predicated region
        $region37: #{tpu_custom_call.1} parent=11 // pred_check
          %p373 = pneg %p253
        $region38: #{tpu_custom_call.1} parent=11 // pred_check_branch
          %375 = sbr.rel (%p373) target = $region40
        $region39: #{tpu_custom_call.1} parent=11 // pred_region
          _
        $region40: #{tpu_custom_call.1} parent=11 // pred_fallthru
          _
        // Predicated region
        $region41: #{tpu_custom_call.1} parent=11 // pred_check
          %p376 = pneg %p274
        $region42: #{tpu_custom_call.1} parent=11 // pred_check_branch
          %378 = sbr.rel (%p376) target = $region44
        $region43: #{tpu_custom_call.1} parent=11 // pred_region
          _
        $region44: #{tpu_custom_call.1} parent=11 // pred_fallthru
          _
      $region12: #{tpu_custom_call.1} parent=5 // pred_fallthru
        _
      %p379 = scmp.lt.s32.totalorder %s28, 2
      // Predicated region
      $region45: #{tpu_custom_call.1} parent=5 // pred_check
        %p380 = pneg %p379
      $region46: #{tpu_custom_call.1} parent=5 // pred_check_branch
        %382 = sbr.rel (%p380) target = $region48
      $region47: #{tpu_custom_call.1} parent=5 // pred_region
        // Predicated region
        $region49: #{tpu_custom_call.1} parent=47 // pred_check
          %p383 = pneg %p48
        $region50: #{tpu_custom_call.1} parent=47 // pred_check_branch
          %385 = sbr.rel (%p383) target = $region52
        $region51: #{tpu_custom_call.1} parent=47 // pred_region
          %s386 = sand.u32 %s38, 1
          %s387 = scalar_lea.sflag [#allocation3], %s386
          %s388 = sand.u32 %s38, 1
          %s389 = smul.addr %s388, 8
          %s390 = scalar_lea.vmem [#allocation2], %s389
          %s392 = ssub.s32 128, 128
          %393 = vsyncadd %s387, %s392
          %s394 = smul.addr %s28, 2
          %s395 = smul.addr %s394, 64
          %s396 = scalar_lea.hbm %s0, %s395
          %s397 = sshll.u32 %s390, 4
          %s398 = int_to_ptr.vmem [resolvable:$true] %s397
          %403 = dma.hbm_to_vmem [thread:$0]  %s396, 128, %s398, %s387, 64, 64, 4
        $region52: #{tpu_custom_call.1} parent=47 // pred_fallthru
          _
        // Predicated region
        $region53: #{tpu_custom_call.1} parent=47 // pred_check
          %p404 = pneg %p74
        $region54: #{tpu_custom_call.1} parent=47 // pred_check_branch
          %406 = sbr.rel (%p404) target = $region56
        $region55: #{tpu_custom_call.1} parent=47 // pred_region
          %s407 = sand.u32 %s28, 1
          %s408 = scalar_lea.sflag [#allocation6], %s407
          %s409 = sand.u32 %s64, 1
          %s410 = smul.addr %s409, 8
          %s411 = scalar_lea.vmem [#allocation5], %s410
          %s413 = ssub.s32 128, 128
          %414 = vsyncadd %s408, %s413
          %s415 = smul.addr %s28, 2
          %s416 = smul.addr %s415, 64
          %s417 = scalar_lea.hbm %s1, %s416
          %s418 = sshll.u32 %s411, 4
          %s419 = int_to_ptr.vmem [resolvable:$true] %s418
          %424 = dma.hbm_to_vmem [thread:$0]  %s417, 128, %s419, %s408, 64, 64, 4
        $region56: #{tpu_custom_call.1} parent=47 // pred_fallthru
          _
        // Predicated region
        $region57: #{tpu_custom_call.1} parent=47 // pred_check
          %p425 = pneg %p100
        $region58: #{tpu_custom_call.1} parent=47 // pred_check_branch
          %427 = sbr.rel (%p425) target = $region60
        $region59: #{tpu_custom_call.1} parent=47 // pred_region
          %s428 = sand.u32 %s28, 1
          %s429 = scalar_lea.sflag [#allocation6], %s428
          %s430 = sand.u32 %s90, 1
          %s431 = smul.addr %s430, 8
          %s432 = scalar_lea.vmem [#allocation7], %s431
          %s434 = ssub.s32 128, 128
          %435 = vsyncadd %s429, %s434
          %s436 = smul.addr %s28, 2
          %s437 = smul.addr %s436, 64
          %s438 = scalar_lea.hbm %s2, %s437
          %s439 = sshll.u32 %s432, 4
          %s440 = int_to_ptr.vmem [resolvable:$true] %s439
          %445 = dma.hbm_to_vmem [thread:$0]  %s438, 128, %s440, %s429, 64, 64, 4
        $region60: #{tpu_custom_call.1} parent=47 // pred_fallthru
          _
      $region48: #{tpu_custom_call.1} parent=5 // pred_fallthru
        _
      %p446 = scmp.le.s32.totalorder 1, %s28
      %p447 = scmp.lt.s32.totalorder %s28, 3
      %p448 = pnand %p446, %p447
      %p449 = pneg %p448
      // Predicated region
      $region61: #{tpu_custom_call.1} parent=5 // pred_check
        _
      $region62: #{tpu_custom_call.1} parent=5 // pred_check_branch
        %451 = sbr.rel (%p448) target = $region64
      $region63: #{tpu_custom_call.1} parent=5 // pred_region
        %s452 = ssub.s32 %s28, 1
        %s453 = sand.u32 %s41, 1
        %s454 = scalar_lea.sflag [#allocation3], %s453
        %s455 = sand.u32 %s41, 1
        %s456 = smul.addr %s455, 8
        %s457 = scalar_lea.vmem [#allocation2], %s456
        // Predicated region
        $region65: #{tpu_custom_call.1} parent=63 // pred_check
          %p458 = pneg %p54
        $region66: #{tpu_custom_call.1} parent=63 // pred_check_branch
          %460 = sbr.rel (%p458) target = $region68
        $region67: #{tpu_custom_call.1} parent=63 // pred_region
          %461 = dma.done %s454, 128
        $region68: #{tpu_custom_call.1} parent=63 // pred_fallthru
          _
        %s462 = sand.u32 %s33, 1
        %s463 = scalar_lea.sflag [#allocation6], %s462
        %s464 = sand.u32 %s67, 1
        %s465 = smul.addr %s464, 8
        %s466 = scalar_lea.vmem [#allocation5], %s465
        // Predicated region
        $region69: #{tpu_custom_call.1} parent=63 // pred_check
          %p467 = pneg %p80
        $region70: #{tpu_custom_call.1} parent=63 // pred_check_branch
          %469 = sbr.rel (%p467) target = $region72
        $region71: #{tpu_custom_call.1} parent=63 // pred_region
          %470 = dma.done %s463, 128
        $region72: #{tpu_custom_call.1} parent=63 // pred_fallthru
          _
        %s471 = sand.u32 %s33, 1
        %s472 = scalar_lea.sflag [#allocation6], %s471
        %s473 = sand.u32 %s93, 1
        %s474 = smul.addr %s473, 8
        %s475 = scalar_lea.vmem [#allocation7], %s474
        // Predicated region
        $region73: #{tpu_custom_call.1} parent=63 // pred_check
          %p476 = pneg %p106
        $region74: #{tpu_custom_call.1} parent=63 // pred_check_branch
          %478 = sbr.rel (%p476) target = $region76
        $region75: #{tpu_custom_call.1} parent=63 // pred_region
          %479 = dma.done %s472, 128
        $region76: #{tpu_custom_call.1} parent=63 // pred_fallthru
          _
        // Predicated region
        $region77: #{tpu_custom_call.1} parent=63 // pred_check
          %p480 = pneg %p127
        $region78: #{tpu_custom_call.1} parent=63 // pred_check_branch
          %482 = sbr.rel (%p480) target = $region80
        $region79: #{tpu_custom_call.1} parent=63 // pred_region
          %483 = dma.done [#allocation9], 1024
        $region80: #{tpu_custom_call.1} parent=63 // pred_fallthru
          _
        // Predicated region
        $region81: #{tpu_custom_call.1} parent=63 // pred_check
          %p484 = pneg %p148
        $region82: #{tpu_custom_call.1} parent=63 // pred_check_branch
          %486 = sbr.rel (%p484) target = $region84
        $region83: #{tpu_custom_call.1} parent=63 // pred_region
          %487 = dma.done [#allocation9], 1024
        $region84: #{tpu_custom_call.1} parent=63 // pred_fallthru
          _
        // Predicated region
        $region85: #{tpu_custom_call.1} parent=63 // pred_check
          %p488 = pneg %p169
        $region86: #{tpu_custom_call.1} parent=63 // pred_check_branch
          %490 = sbr.rel (%p488) target = $region88
        $region87: #{tpu_custom_call.1} parent=63 // pred_region
          %491 = dma.done [#allocation12], 1024
        $region88: #{tpu_custom_call.1} parent=63 // pred_fallthru
          _
        // Predicated region
        $region89: #{tpu_custom_call.1} parent=63 // pred_check
          %p492 = pneg %p190
        $region90: #{tpu_custom_call.1} parent=63 // pred_check_branch
          %494 = sbr.rel (%p492) target = $region92
        $region91: #{tpu_custom_call.1} parent=63 // pred_region
          %495 = dma.done [#allocation12], 1024
        $region92: #{tpu_custom_call.1} parent=63 // pred_fallthru
          _
        %s496 = sand.u32 %s41, 1
        %s497 = scalar_lea.sflag [#allocation3], %s496
        %s498 = sand.u32 %s41, 1
        %s499 = smul.addr %s498, 8
        %s500 = scalar_lea.vmem [#allocation2], %s499
        %p501 = pneg %p54
        %p502 = pneg %p51
        %s503 = sand.u32 %s33, 1
        %s504 = scalar_lea.sflag [#allocation6], %s503
        %s505 = sand.u32 %s67, 1
        %s506 = smul.addr %s505, 8
        %s507 = scalar_lea.vmem [#allocation5], %s506
        %p508 = pneg %p80
        %p509 = pneg %p77
        %s510 = sand.u32 %s33, 1
        %s511 = scalar_lea.sflag [#allocation6], %s510
        %s512 = sand.u32 %s93, 1
        %s513 = smul.addr %s512, 8
        %s514 = scalar_lea.vmem [#allocation7], %s513
        %p515 = pneg %p106
        %p516 = pneg %p103
        %p517 = pneg %p127
        %p518 = pneg %p124
        %p519 = pneg %p148
        %p520 = pneg %p145
        %p521 = pneg %p169
        %p522 = pneg %p166
        %p523 = pneg %p190
        %p524 = pneg %p187
        %p525 = pneg %p211
        %p526 = pneg %p208
        %p527 = pneg %p232
        %p528 = pneg %p229
        %p529 = pneg %p253
        %p530 = pneg %p250
        %p531 = pneg %p274
        %p532 = pneg %p271
        %p533 = pneg %p300
        %p534 = pneg %p297
        %s535 = sand.u32 %s287, 1
        %s536 = scalar_lea.sflag [#allocation4], %s535
        %s537 = sand.u32 %s287, 1
        %s538 = smul.addr %s537, 16
        %s539 = scalar_lea.vmem [#allocation14], %s538
        %v541 = vld [vmem:[%s457] sm:$0xf]
        %v542 = vld [vmem:[%s457 + $0x4] sm:$0xf]
        %v543 = vld [vmem:[%s466] sm:$0xf]
        %v544 = vld [vmem:[%s466 + $0x4] sm:$0xf]
        %v545 = vld [vmem:[%s475] sm:$0xf]
        %v546 = vld [vmem:[%s475 + $0x4] sm:$0xf]
        %v547 = vld [vmem:[#allocation8] sm:$0xf]
        %v548 = vld [vmem:[#allocation8 + $0x4] sm:$0xf]
        %v549 = vld [vmem:[#allocation8 + $0x8] sm:$0xf]
        %v550 = vld [vmem:[#allocation8 + $0xc] sm:$0xf]
        %v551 = vld [vmem:[#allocation8 + $0x10] sm:$0xf]
        %v552 = vld [vmem:[#allocation8 + $0x14] sm:$0xf]
        %v553 = vld [vmem:[#allocation8 + $0x18] sm:$0xf]
        %v554 = vld [vmem:[#allocation8 + $0x1c] sm:$0xf]
        %v555 = vld [vmem:[#allocation8 + $0x20] sm:$0xf]
        %v556 = vld [vmem:[#allocation8 + $0x24] sm:$0xf]
        %v557 = vld [vmem:[#allocation8 + $0x28] sm:$0xf]
        %v558 = vld [vmem:[#allocation8 + $0x2c] sm:$0xf]
        %v559 = vld [vmem:[#allocation8 + $0x30] sm:$0xf]
        %v560 = vld [vmem:[#allocation8 + $0x34] sm:$0xf]
        %v561 = vld [vmem:[#allocation8 + $0x38] sm:$0xf]
        %v562 = vld [vmem:[#allocation8 + $0x3c] sm:$0xf]
        %v563 = vld [vmem:[%s7] sm:$0x1]
        %v565 = vlaneseq
        %v566 = vshrl.u32 %v565, 7
        %v567 = vsub.s32 0, %v566
        %v568 = vrot.slane %v563, %v567
        %v572 = vunpack.c.l.b16 %v541
        %v573 = vunpack.c.l.b16 %v542
        %v574 = vpack.c.b16 %v573, %v572
        %v592 = vunpack.c.l.b16 %v547
        %v593 = vunpack.c.l.b16 %v548
        %v594 = vunpack.c.l.b16 %v549
        %v595 = vunpack.c.l.b16 %v550
        %v596 = vunpack.c.l.b16 %v551
        %v597 = vunpack.c.l.b16 %v552
        %v598 = vunpack.c.l.b16 %v553
        %v599 = vunpack.c.l.b16 %v554
        %v600 = vunpack.c.l.b16 %v555
        %v601 = vunpack.c.l.b16 %v556
        %v602 = vunpack.c.l.b16 %v557
        %v603 = vunpack.c.l.b16 %v558
        %v604 = vunpack.c.l.b16 %v559
        %v605 = vunpack.c.l.b16 %v560
        %v606 = vunpack.c.l.b16 %v561
        %v607 = vunpack.c.l.b16 %v562
        %v608 = vpack.c.b16 %v593, %v592
        %v609 = vpack.c.b16 %v595, %v594
        %v610 = vpack.c.b16 %v597, %v596
        %v611 = vpack.c.b16 %v599, %v598
        %v612 = vpack.c.b16 %v601, %v600
        %v613 = vpack.c.b16 %v603, %v602
        %v614 = vpack.c.b16 %v605, %v604
        %v615 = vpack.c.b16 %v607, %v606
        %624 = vmatprep.subr.bf16.mxu0 0
        %625 = vmatpush1.bf16.msra.mxu0 %v608
        %626 = vmatprep.subr.bf16.mxu0 0
        %627 = vmatpush1.bf16.msra.mxu0 %v609
        %628 = vmatprep.subr.bf16.mxu0 0
        %629 = vmatpush1.bf16.msra.mxu0 %v610
        %630 = vmatprep.subr.bf16.mxu0 0
        %631 = vmatpush1.bf16.msra.mxu0 %v611
        %632 = vmatprep.subr.bf16.mxu0 0
        %633 = vmatpush1.bf16.msra.mxu0 %v612
        %634 = vmatprep.subr.bf16.mxu0 0
        %635 = vmatpush1.bf16.msra.mxu0 %v613
        %636 = vmatprep.subr.bf16.mxu0 0
        %637 = vmatpush1.bf16.msra.mxu0 %v614
        %638 = vmatprep.subr.bf16.mxu0 0
        %639 = vmatpush1.bf16.msra.mxu0 %v615
        %640 = vmatprep.subr.bf16.mxu0 0
        %641 = vmatpush1.bf16.msra.mxu0 0
        %642 = vmatprep.subr.bf16.mxu0 0
        %643 = vmatpush1.bf16.msra.mxu0 0
        %644 = vmatprep.subr.bf16.mxu0 0
        %645 = vmatpush1.bf16.msra.mxu0 0
        %646 = vmatprep.subr.bf16.mxu0 0
        %647 = vmatpush1.bf16.msra.mxu0 0
        %648 = vmatprep.subr.bf16.mxu0 0
        %649 = vmatpush1.bf16.msra.mxu0 0
        %650 = vmatprep.subr.bf16.mxu0 0
        %651 = vmatpush1.bf16.msra.mxu0 0
        %652 = vmatprep.subr.bf16.mxu0 0
        %653 = vmatpush1.bf16.msra.mxu0 0
        %654 = vmatprep.subr.bf16.mxu0 0
        %655 = vmatpush1.bf16.msra.mxu0 0
        %656 = vmatprep.mubr.bf16.mxu0 0
        %657 = vmatmul.mubr.bf16.gmra.mrb[0].mxu0 %v574
        %v658 = vpop.f32.mrb[0].mxu0
        %v659 = vadd.f32 %v568, %v658
        %v660 = vpop.f32.mrb[0].mxu0
        %v661 = vpop.f32.mrb[0].mxu0
        %v662 = vadd.f32 %v568, %v661
        %v663 = vpop.f32.mrb[0].mxu0
        %664 = vdwg.mxu0
        %v665 = vld [vmem:[#allocation10] sm:$0xf]
        %v666 = vld [vmem:[#allocation10 + $0x4] sm:$0xf]
        %v667 = vld [vmem:[#allocation10 + $0x8] sm:$0xf]
        %v668 = vld [vmem:[#allocation10 + $0xc] sm:$0xf]
        %v669 = vld [vmem:[#allocation10 + $0x10] sm:$0xf]
        %v670 = vld [vmem:[#allocation10 + $0x14] sm:$0xf]
        %v671 = vld [vmem:[#allocation10 + $0x18] sm:$0xf]
        %v672 = vld [vmem:[#allocation10 + $0x1c] sm:$0xf]
        %v673 = vld [vmem:[#allocation10 + $0x20] sm:$0xf]
        %v674 = vld [vmem:[#allocation10 + $0x24] sm:$0xf]
        %v675 = vld [vmem:[#allocation10 + $0x28] sm:$0xf]
        %v676 = vld [vmem:[#allocation10 + $0x2c] sm:$0xf]
        %v677 = vld [vmem:[#allocation10 + $0x30] sm:$0xf]
        %v678 = vld [vmem:[#allocation10 + $0x34] sm:$0xf]
        %v679 = vld [vmem:[#allocation10 + $0x38] sm:$0xf]
        %v680 = vld [vmem:[#allocation10 + $0x3c] sm:$0xf]
        %v681 = vld [vmem:[%s8] sm:$0x1]
        %v683 = vlaneseq
        %v684 = vshrl.u32 %v683, 7
        %v685 = vsub.s32 0, %v684
        %v686 = vrot.slane %v681, %v685
        %v690 = vunpack.c.l.b16 %v543
        %v691 = vunpack.c.l.b16 %v544
        %v692 = vpack.c.b16 %v691, %v690
        %v710 = vunpack.c.l.b16 %v665
        %v711 = vunpack.c.l.b16 %v666
        %v712 = vunpack.c.l.b16 %v667
        %v713 = vunpack.c.l.b16 %v668
        %v714 = vunpack.c.l.b16 %v669
        %v715 = vunpack.c.l.b16 %v670
        %v716 = vunpack.c.l.b16 %v671
        %v717 = vunpack.c.l.b16 %v672
        %v718 = vunpack.c.l.b16 %v673
        %v719 = vunpack.c.l.b16 %v674
        %v720 = vunpack.c.l.b16 %v675
        %v721 = vunpack.c.l.b16 %v676
        %v722 = vunpack.c.l.b16 %v677
        %v723 = vunpack.c.l.b16 %v678
        %v724 = vunpack.c.l.b16 %v679
        %v725 = vunpack.c.l.b16 %v680
        %v726 = vpack.c.b16 %v711, %v710
        %v727 = vpack.c.b16 %v713, %v712
        %v728 = vpack.c.b16 %v715, %v714
        %v729 = vpack.c.b16 %v717, %v716
        %v730 = vpack.c.b16 %v719, %v718
        %v731 = vpack.c.b16 %v721, %v720
        %v732 = vpack.c.b16 %v723, %v722
        %v733 = vpack.c.b16 %v725, %v724
        %742 = vmatprep.subr.bf16.mxu0 0
        %743 = vmatpush1.bf16.msra.mxu0 %v726
        %744 = vmatprep.subr.bf16.mxu0 0
        %745 = vmatpush1.bf16.msra.mxu0 %v727
        %746 = vmatprep.subr.bf16.mxu0 0
        %747 = vmatpush1.bf16.msra.mxu0 %v728
        %748 = vmatprep.subr.bf16.mxu0 0
        %749 = vmatpush1.bf16.msra.mxu0 %v729
        %750 = vmatprep.subr.bf16.mxu0 0
        %751 = vmatpush1.bf16.msra.mxu0 %v730
        %752 = vmatprep.subr.bf16.mxu0 0
        %753 = vmatpush1.bf16.msra.mxu0 %v731
        %754 = vmatprep.subr.bf16.mxu0 0
        %755 = vmatpush1.bf16.msra.mxu0 %v732
        %756 = vmatprep.subr.bf16.mxu0 0
        %757 = vmatpush1.bf16.msra.mxu0 %v733
        %758 = vmatprep.subr.bf16.mxu0 0
        %759 = vmatpush1.bf16.msra.mxu0 0
        %760 = vmatprep.subr.bf16.mxu0 0
        %761 = vmatpush1.bf16.msra.mxu0 0
        %762 = vmatprep.subr.bf16.mxu0 0
        %763 = vmatpush1.bf16.msra.mxu0 0
        %764 = vmatprep.subr.bf16.mxu0 0
        %765 = vmatpush1.bf16.msra.mxu0 0
        %766 = vmatprep.subr.bf16.mxu0 0
        %767 = vmatpush1.bf16.msra.mxu0 0
        %768 = vmatprep.subr.bf16.mxu0 0
        %769 = vmatpush1.bf16.msra.mxu0 0
        %770 = vmatprep.subr.bf16.mxu0 0
        %771 = vmatpush1.bf16.msra.mxu0 0
        %772 = vmatprep.subr.bf16.mxu0 0
        %773 = vmatpush1.bf16.msra.mxu0 0
        %774 = vmatprep.mubr.bf16.mxu0 0
        %775 = vmatmul.mubr.bf16.gmra.mrb[0].mxu0 %v692
        %v776 = vpop.f32.mrb[0].mxu0
        %v777 = vadd.f32 %v686, %v776
        %v778 = vpop.f32.mrb[0].mxu0
        %v779 = vpop.f32.mrb[0].mxu0
        %v780 = vadd.f32 %v686, %v779
        %v781 = vpop.f32.mrb[0].mxu0
        %782 = vdwg.mxu0
        %v783 = vld [vmem:[#allocation11] sm:$0xf]
        %v784 = vld [vmem:[#allocation11 + $0x4] sm:$0xf]
        %v785 = vld [vmem:[#allocation11 + $0x8] sm:$0xf]
        %v786 = vld [vmem:[#allocation11 + $0xc] sm:$0xf]
        %v787 = vld [vmem:[#allocation11 + $0x10] sm:$0xf]
        %v788 = vld [vmem:[#allocation11 + $0x14] sm:$0xf]
        %v789 = vld [vmem:[#allocation11 + $0x18] sm:$0xf]
        %v790 = vld [vmem:[#allocation11 + $0x1c] sm:$0xf]
        %v791 = vld [vmem:[#allocation11 + $0x20] sm:$0xf]
        %v792 = vld [vmem:[#allocation11 + $0x24] sm:$0xf]
        %v793 = vld [vmem:[#allocation11 + $0x28] sm:$0xf]
        %v794 = vld [vmem:[#allocation11 + $0x2c] sm:$0xf]
        %v795 = vld [vmem:[#allocation11 + $0x30] sm:$0xf]
        %v796 = vld [vmem:[#allocation11 + $0x34] sm:$0xf]
        %v797 = vld [vmem:[#allocation11 + $0x38] sm:$0xf]
        %v798 = vld [vmem:[#allocation11 + $0x3c] sm:$0xf]
        %v799 = vld [vmem:[%s9] sm:$0x1]
        %v801 = vlaneseq
        %v802 = vshrl.u32 %v801, 7
        %v803 = vsub.s32 0, %v802
        %v804 = vrot.slane %v799, %v803
        %v808 = vunpack.c.l.b16 %v545
        %v809 = vunpack.c.l.b16 %v546
        %v810 = vpack.c.b16 %v809, %v808
        %v828 = vunpack.c.l.b16 %v783
        %v829 = vunpack.c.l.b16 %v784
        %v830 = vunpack.c.l.b16 %v785
        %v831 = vunpack.c.l.b16 %v786
        %v832 = vunpack.c.l.b16 %v787
        %v833 = vunpack.c.l.b16 %v788
        %v834 = vunpack.c.l.b16 %v789
        %v835 = vunpack.c.l.b16 %v790
        %v836 = vunpack.c.l.b16 %v791
        %v837 = vunpack.c.l.b16 %v792
        %v838 = vunpack.c.l.b16 %v793
        %v839 = vunpack.c.l.b16 %v794
        %v840 = vunpack.c.l.b16 %v795
        %v841 = vunpack.c.l.b16 %v796
        %v842 = vunpack.c.l.b16 %v797
        %v843 = vunpack.c.l.b16 %v798
        %v844 = vpack.c.b16 %v829, %v828
        %v845 = vpack.c.b16 %v831, %v830
        %v846 = vpack.c.b16 %v833, %v832
        %v847 = vpack.c.b16 %v835, %v834
        %v848 = vpack.c.b16 %v837, %v836
        %v849 = vpack.c.b16 %v839, %v838
        %v850 = vpack.c.b16 %v841, %v840
        %v851 = vpack.c.b16 %v843, %v842
        %860 = vmatprep.subr.bf16.mxu0 0
        %861 = vmatpush1.bf16.msra.mxu0 %v844
        %862 = vmatprep.subr.bf16.mxu0 0
        %863 = vmatpush1.bf16.msra.mxu0 %v845
        %864 = vmatprep.subr.bf16.mxu0 0
        %865 = vmatpush1.bf16.msra.mxu0 %v846
        %866 = vmatprep.subr.bf16.mxu0 0
        %867 = vmatpush1.bf16.msra.mxu0 %v847
        %868 = vmatprep.subr.bf16.mxu0 0
        %869 = vmatpush1.bf16.msra.mxu0 %v848
        %870 = vmatprep.subr.bf16.mxu0 0
        %871 = vmatpush1.bf16.msra.mxu0 %v849
        %872 = vmatprep.subr.bf16.mxu0 0
        %873 = vmatpush1.bf16.msra.mxu0 %v850
        %874 = vmatprep.subr.bf16.mxu0 0
        %875 = vmatpush1.bf16.msra.mxu0 %v851
        %876 = vmatprep.subr.bf16.mxu0 0
        %877 = vmatpush1.bf16.msra.mxu0 0
        %878 = vmatprep.subr.bf16.mxu0 0
        %879 = vmatpush1.bf16.msra.mxu0 0
        %880 = vmatprep.subr.bf16.mxu0 0
        %881 = vmatpush1.bf16.msra.mxu0 0
        %882 = vmatprep.subr.bf16.mxu0 0
        %883 = vmatpush1.bf16.msra.mxu0 0
        %884 = vmatprep.subr.bf16.mxu0 0
        %885 = vmatpush1.bf16.msra.mxu0 0
        %886 = vmatprep.subr.bf16.mxu0 0
        %887 = vmatpush1.bf16.msra.mxu0 0
        %888 = vmatprep.subr.bf16.mxu0 0
        %889 = vmatpush1.bf16.msra.mxu0 0
        %890 = vmatprep.subr.bf16.mxu0 0
        %891 = vmatpush1.bf16.msra.mxu0 0
        %892 = vmatprep.mubr.bf16.mxu0 0
        %893 = vmatmul.mubr.bf16.gmra.mrb[0].mxu0 %v810
        %v894 = vpop.f32.mrb[0].mxu0
        %v895 = vadd.f32 %v804, %v894
        %v896 = vpop.f32.mrb[0].mxu0
        %v897 = vpop.f32.mrb[0].mxu0
        %v898 = vadd.f32 %v804, %v897
        %v899 = vpop.f32.mrb[0].mxu0
        %900 = vdwg.mxu0
        %v901 = vpack.c.bf16 %v662, %v659
        %v902 = vpack.c.bf16 %v780, %v777
        %v903 = vpack.c.bf16 %v898, %v895
        %vm904 = vcmask 130048
        %v906 = vsel %vm904, %v901, 0
        %v909 = vsel %vm904, %v902, 0
        %911 = vmatprep.subr.bf16.mxu0 0
        %912 = vmatpush1.bf16.xpose.msra.mxu0 %v909
        %913 = vmatprep.subr.bf16.mxu0 0
        %914 = vmatpush1.bf16.xpose.msra.mxu0 0
        %915 = vmatprep.subr.bf16.mxu0 0
        %916 = vmatpush1.bf16.xpose.msra.mxu0 0
        %917 = vmatprep.subr.bf16.mxu0 0
        %918 = vmatpush1.bf16.xpose.msra.mxu0 0
        %919 = vmatprep.subr.bf16.mxu0 0
        %920 = vmatpush1.bf16.xpose.msra.mxu0 0
        %921 = vmatprep.subr.bf16.mxu0 0
        %922 = vmatpush1.bf16.xpose.msra.mxu0 0
        %923 = vmatprep.subr.bf16.mxu0 0
        %924 = vmatpush1.bf16.xpose.msra.mxu0 0
        %925 = vmatprep.subr.bf16.mxu0 0
        %926 = vmatpush1.bf16.xpose.msra.mxu0 0
        %927 = vmatprep.subr.bf16.mxu0 0
        %928 = vmatpush1.bf16.xpose.msra.mxu0 0
        %929 = vmatprep.subr.bf16.mxu0 0
        %930 = vmatpush1.bf16.xpose.msra.mxu0 0
        %931 = vmatprep.subr.bf16.mxu0 0
        %932 = vmatpush1.bf16.xpose.msra.mxu0 0
        %933 = vmatprep.subr.bf16.mxu0 0
        %934 = vmatpush1.bf16.xpose.msra.mxu0 0
        %935 = vmatprep.subr.bf16.mxu0 0
        %936 = vmatpush1.bf16.xpose.msra.mxu0 0
        %937 = vmatprep.subr.bf16.mxu0 0
        %938 = vmatpush1.bf16.xpose.msra.mxu0 0
        %939 = vmatprep.subr.bf16.mxu0 0
        %940 = vmatpush1.bf16.xpose.msra.mxu0 0
        %941 = vmatprep.subr.bf16.mxu0 0
        %942 = vmatpush1.bf16.xpose.msra.mxu0 0
        %943 = vmatprep.mubr.bf16.mxu0 0
        %944 = vmatmul.mubr.bf16.gmra.mrb[0].mxu0 %v906
        %v945 = vpop.f32.mrb[0].mxu0
        %v946 = vadd.f32 0.0, %v945
        %v947 = vpop.f32.mrb[0].mxu0
        %v948 = vpop.f32.mrb[0].mxu0
        %v949 = vadd.f32 0.0, %v948
        %v950 = vpop.f32.mrb[0].mxu0
        %951 = vdwg.mxu0
        %v952 = vmul.f32 %v946, 0.25
        %v953 = vmul.f32 %v949, 0.25
        %v954 = vsel %vm904, %v952, -inf
        %955 = vmax.xlane.f32.xlu0 %v954
        %v956 = vpop.xlane.xlu0 %955
        %v957 = vsel %vm904, %v953, -inf
        %958 = vmax.xlane.f32.xlu0 %v957
        %v959 = vpop.xlane.xlu0 %958
        %v960 = vsub.f32 %v952, %v956
        %v961 = vsub.f32 %v953, %v959
        %v962 = vmul.f32 %v960, 1.442695
        %v963 = vpow.pop %v962
        %v964 = vmul.f32 %v961, 1.442695
        %v965 = vpow.pop %v964
        %v966 = vsel %vm904, %v963, 0.0
        %967 = vadd.xlane.f32.xlu0 %v966
        %v968 = vpop.xlane.xlu0 %967
        %v969 = vsel %vm904, %v965, 0.0
        %970 = vadd.xlane.f32.xlu0 %v969
        %v971 = vpop.xlane.xlu0 %970
        %v972 = vrcp.pop %v968
        %v973 = vrcp.pop %v971
        %v974 = vmul.f32 %v963, %v972
        %v975 = vmul.f32 %v965, %v973
        %v976 = vpack.c.bf16 %v975, %v974
        %v978 = vsel %vm904, %v976, 0
        %980 = vmatprep.subr.bf16.mxu0 0
        %981 = vmatpush1.bf16.msra.mxu0 %v903
        %982 = vmatprep.subr.bf16.mxu0 0
        %983 = vmatpush1.bf16.msra.mxu0 0
        %984 = vmatprep.subr.bf16.mxu0 0
        %985 = vmatpush1.bf16.msra.mxu0 0
        %986 = vmatprep.subr.bf16.mxu0 0
        %987 = vmatpush1.bf16.msra.mxu0 0
        %988 = vmatprep.subr.bf16.mxu0 0
        %989 = vmatpush1.bf16.msra.mxu0 0
        %990 = vmatprep.subr.bf16.mxu0 0
        %991 = vmatpush1.bf16.msra.mxu0 0
        %992 = vmatprep.subr.bf16.mxu0 0
        %993 = vmatpush1.bf16.msra.mxu0 0
        %994 = vmatprep.subr.bf16.mxu0 0
        %995 = vmatpush1.bf16.msra.mxu0 0
        %996 = vmatprep.subr.bf16.mxu0 0
        %997 = vmatpush1.bf16.msra.mxu0 0
        %998 = vmatprep.subr.bf16.mxu0 0
        %999 = vmatpush1.bf16.msra.mxu0 0
        %1000 = vmatprep.subr.bf16.mxu0 0
        %1001 = vmatpush1.bf16.msra.mxu0 0
        %1002 = vmatprep.subr.bf16.mxu0 0
        %1003 = vmatpush1.bf16.msra.mxu0 0
        %1004 = vmatprep.subr.bf16.mxu0 0
        %1005 = vmatpush1.bf16.msra.mxu0 0
        %1006 = vmatprep.subr.bf16.mxu0 0
        %1007 = vmatpush1.bf16.msra.mxu0 0
        %1008 = vmatprep.subr.bf16.mxu0 0
        %1009 = vmatpush1.bf16.msra.mxu0 0
        %1010 = vmatprep.subr.bf16.mxu0 0
        %1011 = vmatpush1.bf16.msra.mxu0 0
        %1012 = vmatprep.mubr.bf16.mxu0 0
        %1013 = vmatmul.mubr.bf16.gmra.mrb[0].mxu0 %v978
        %v1014 = vpop.f32.mrb[0].mxu0
        %v1015 = vadd.f32 0.0, %v1014
        %v1016 = vpop.f32.mrb[0].mxu0
        %v1017 = vpop.f32.mrb[0].mxu0
        %v1018 = vadd.f32 0.0, %v1017
        %v1019 = vpop.f32.mrb[0].mxu0
        %1020 = vdwg.mxu0
        %1022 = vrot.lane.b32.xlu0 %v901, 112
        %v1023 = vpop.permute.xlu0 %1022
        %1025 = vrot.lane.b32.xlu0 %v902, 112
        %v1026 = vpop.permute.xlu0 %1025
        %v1028 = vsel %vm904, %v1023, 0
        %v1031 = vsel %vm904, %v1026, 0
        %1033 = vmatprep.subr.bf16.mxu0 0
        %1034 = vmatpush1.bf16.xpose.msra.mxu0 %v1031
        %1035 = vmatprep.subr.bf16.mxu0 0
        %1036 = vmatpush1.bf16.xpose.msra.mxu0 0
        %1037 = vmatprep.subr.bf16.mxu0 0
        %1038 = vmatpush1.bf16.xpose.msra.mxu0 0
        %1039 = vmatprep.subr.bf16.mxu0 0
        %1040 = vmatpush1.bf16.xpose.msra.mxu0 0
        %1041 = vmatprep.subr.bf16.mxu0 0
        %1042 = vmatpush1.bf16.xpose.msra.mxu0 0
        %1043 = vmatprep.subr.bf16.mxu0 0
        %1044 = vmatpush1.bf16.xpose.msra.mxu0 0
        %1045 = vmatprep.subr.bf16.mxu0 0
        %1046 = vmatpush1.bf16.xpose.msra.mxu0 0
        %1047 = vmatprep.subr.bf16.mxu0 0
        %1048 = vmatpush1.bf16.xpose.msra.mxu0 0
        %1049 = vmatprep.subr.bf16.mxu0 0
        %1050 = vmatpush1.bf16.xpose.msra.mxu0 0
        %1051 = vmatprep.subr.bf16.mxu0 0
        %1052 = vmatpush1.bf16.xpose.msra.mxu0 0
        %1053 = vmatprep.subr.bf16.mxu0 0
        %1054 = vmatpush1.bf16.xpose.msra.mxu0 0
        %1055 = vmatprep.subr.bf16.mxu0 0
        %1056 = vmatpush1.bf16.xpose.msra.mxu0 0
        %1057 = vmatprep.subr.bf16.mxu0 0
        %1058 = vmatpush1.bf16.xpose.msra.mxu0 0
        %1059 = vmatprep.subr.bf16.mxu0 0
        %1060 = vmatpush1.bf16.xpose.msra.mxu0 0
        %1061 = vmatprep.subr.bf16.mxu0 0
        %1062 = vmatpush1.bf16.xpose.msra.mxu0 0
        %1063 = vmatprep.subr.bf16.mxu0 0
        %1064 = vmatpush1.bf16.xpose.msra.mxu0 0
        %1065 = vmatprep.mubr.bf16.mxu0 0
        %1066 = vmatmul.mubr.bf16.gmra.mrb[0].mxu0 %v1028
        %v1067 = vpop.f32.mrb[0].mxu0
        %v1068 = vadd.f32 0.0, %v1067
        %v1069 = vpop.f32.mrb[0].mxu0
        %v1070 = vpop.f32.mrb[0].mxu0
        %v1071 = vadd.f32 0.0, %v1070
        %v1072 = vpop.f32.mrb[0].mxu0
        %1073 = vdwg.mxu0
        %v1074 = vmul.f32 %v1068, 0.25
        %v1075 = vmul.f32 %v1071, 0.25
        %v1076 = vsel %vm904, %v1074, -inf
        %1077 = vmax.xlane.f32.xlu0 %v1076
        %v1078 = vpop.xlane.xlu0 %1077
        %v1079 = vsel %vm904, %v1075, -inf
        %1080 = vmax.xlane.f32.xlu0 %v1079
        %v1081 = vpop.xlane.xlu0 %1080
        %v1082 = vsub.f32 %v1074, %v1078
        %v1083 = vsub.f32 %v1075, %v1081
        %v1084 = vmul.f32 %v1082, 1.442695
        %v1085 = vpow.pop %v1084
        %v1086 = vmul.f32 %v1083, 1.442695
        %v1087 = vpow.pop %v1086
        %v1088 = vsel %vm904, %v1085, 0.0
        %1089 = vadd.xlane.f32.xlu0 %v1088
        %v1090 = vpop.xlane.xlu0 %1089
        %v1091 = vsel %vm904, %v1087, 0.0
        %1092 = vadd.xlane.f32.xlu0 %v1091
        %v1093 = vpop.xlane.xlu0 %1092
        %v1094 = vrcp.pop %v1090
        %v1095 = vrcp.pop %v1093
        %v1096 = vmul.f32 %v1085, %v1094
        %v1097 = vmul.f32 %v1087, %v1095
        %v1098 = vpack.c.bf16 %v1097, %v1096
        %1100 = vrot.lane.b32.xlu0 %v903, 112
        %v1101 = vpop.permute.xlu0 %1100
        %v1104 = vsel %vm904, %v1098, 0
        %1106 = vmatprep.subr.bf16.mxu0 0
        %1107 = vmatpush1.bf16.msra.mxu0 %v1101
        %1108 = vmatprep.subr.bf16.mxu0 0
        %1109 = vmatpush1.bf16.msra.mxu0 0
        %1110 = vmatprep.subr.bf16.mxu0 0
        %1111 = vmatpush1.bf16.msra.mxu0 0
        %1112 = vmatprep.subr.bf16.mxu0 0
        %1113 = vmatpush1.bf16.msra.mxu0 0
        %1114 = vmatprep.subr.bf16.mxu0 0
        %1115 = vmatpush1.bf16.msra.mxu0 0
        %1116 = vmatprep.subr.bf16.mxu0 0
        %1117 = vmatpush1.bf16.msra.mxu0 0
        %1118 = vmatprep.subr.bf16.mxu0 0
        %1119 = vmatpush1.bf16.msra.mxu0 0
        %1120 = vmatprep.subr.bf16.mxu0 0
        %1121 = vmatpush1.bf16.msra.mxu0 0
        %1122 = vmatprep.subr.bf16.mxu0 0
        %1123 = vmatpush1.bf16.msra.mxu0 0
        %1124 = vmatprep.subr.bf16.mxu0 0
        %1125 = vmatpush1.bf16.msra.mxu0 0
        %1126 = vmatprep.subr.bf16.mxu0 0
        %1127 = vmatpush1.bf16.msra.mxu0 0
        %1128 = vmatprep.subr.bf16.mxu0 0
        %1129 = vmatpush1.bf16.msra.mxu0 0
        %1130 = vmatprep.subr.bf16.mxu0 0
        %1131 = vmatpush1.bf16.msra.mxu0 0
        %1132 = vmatprep.subr.bf16.mxu0 0
        %1133 = vmatpush1.bf16.msra.mxu0 0
        %1134 = vmatprep.subr.bf16.mxu0 0
        %1135 = vmatpush1.bf16.msra.mxu0 0
        %1136 = vmatprep.subr.bf16.mxu0 0
        %1137 = vmatpush1.bf16.msra.mxu0 0
        %1138 = vmatprep.mubr.bf16.mxu0 0
        %1139 = vmatmul.mubr.bf16.gmra.mrb[0].mxu0 %v1104
        %v1140 = vpop.f32.mrb[0].mxu0
        %v1141 = vadd.f32 0.0, %v1140
        %v1142 = vpop.f32.mrb[0].mxu0
        %v1143 = vpop.f32.mrb[0].mxu0
        %v1144 = vadd.f32 0.0, %v1143
        %v1145 = vpop.f32.mrb[0].mxu0
        %1146 = vdwg.mxu0
        %1147 = vrot.lane.b32.xlu0 %v901, 96
        %v1148 = vpop.permute.xlu0 %1147
        %1149 = vrot.lane.b32.xlu0 %v902, 96
        %v1150 = vpop.permute.xlu0 %1149
        %v1152 = vsel %vm904, %v1148, 0
        %v1155 = vsel %vm904, %v1150, 0
        %1157 = vmatprep.subr.bf16.mxu0 0
        %1158 = vmatpush1.bf16.xpose.msra.mxu0 %v1155
        %1159 = vmatprep.subr.bf16.mxu0 0
        %1160 = vmatpush1.bf16.xpose.msra.mxu0 0
        %1161 = vmatprep.subr.bf16.mxu0 0
        %1162 = vmatpush1.bf16.xpose.msra.mxu0 0
        %1163 = vmatprep.subr.bf16.mxu0 0
        %1164 = vmatpush1.bf16.xpose.msra.mxu0 0
        %1165 = vmatprep.subr.bf16.mxu0 0
        %1166 = vmatpush1.bf16.xpose.msra.mxu0 0
        %1167 = vmatprep.subr.bf16.mxu0 0
        %1168 = vmatpush1.bf16.xpose.msra.mxu0 0
        %1169 = vmatprep.subr.bf16.mxu0 0
        %1170 = vmatpush1.bf16.xpose.msra.mxu0 0
        %1171 = vmatprep.subr.bf16.mxu0 0
        %1172 = vmatpush1.bf16.xpose.msra.mxu0 0
        %1173 = vmatprep.subr.bf16.mxu0 0
        %1174 = vmatpush1.bf16.xpose.msra.mxu0 0
        %1175 = vmatprep.subr.bf16.mxu0 0
        %1176 = vmatpush1.bf16.xpose.msra.mxu0 0
        %1177 = vmatprep.subr.bf16.mxu0 0
        %1178 = vmatpush1.bf16.xpose.msra.mxu0 0
        %1179 = vmatprep.subr.bf16.mxu0 0
        %1180 = vmatpush1.bf16.xpose.msra.mxu0 0
        %1181 = vmatprep.subr.bf16.mxu0 0
        %1182 = vmatpush1.bf16.xpose.msra.mxu0 0
        %1183 = vmatprep.subr.bf16.mxu0 0
        %1184 = vmatpush1.bf16.xpose.msra.mxu0 0
        %1185 = vmatprep.subr.bf16.mxu0 0
        %1186 = vmatpush1.bf16.xpose.msra.mxu0 0
        %1187 = vmatprep.subr.bf16.mxu0 0
        %1188 = vmatpush1.bf16.xpose.msra.mxu0 0
        %1189 = vmatprep.mubr.bf16.mxu0 0
        %1190 = vmatmul.mubr.bf16.gmra.mrb[0].mxu0 %v1152
        %v1191 = vpop.f32.mrb[0].mxu0
        %v1192 = vadd.f32 0.0, %v1191
        %v1193 = vpop.f32.mrb[0].mxu0
        %v1194 = vpop.f32.mrb[0].mxu0
        %v1195 = vadd.f32 0.0, %v1194
        %v1196 = vpop.f32.mrb[0].mxu0
        %1197 = vdwg.mxu0
        %v1198 = vmul.f32 %v1192, 0.25
        %v1199 = vmul.f32 %v1195, 0.25
        %v1200 = vsel %vm904, %v1198, -inf
        %1201 = vmax.xlane.f32.xlu0 %v1200
        %v1202 = vpop.xlane.xlu0 %1201
        %v1203 = vsel %vm904, %v1199, -inf
        %1204 = vmax.xlane.f32.xlu0 %v1203
        %v1205 = vpop.xlane.xlu0 %1204
        %v1206 = vsub.f32 %v1198, %v1202
        %v1207 = vsub.f32 %v1199, %v1205
        %v1208 = vmul.f32 %v1206, 1.442695
        %v1209 = vpow.pop %v1208
        %v1210 = vmul.f32 %v1207, 1.442695
        %v1211 = vpow.pop %v1210
        %v1212 = vsel %vm904, %v1209, 0.0
        %1213 = vadd.xlane.f32.xlu0 %v1212
        %v1214 = vpop.xlane.xlu0 %1213
        %v1215 = vsel %vm904, %v1211, 0.0
        %1216 = vadd.xlane.f32.xlu0 %v1215
        %v1217 = vpop.xlane.xlu0 %1216
        %v1218 = vrcp.pop %v1214
        %v1219 = vrcp.pop %v1217
        %v1220 = vmul.f32 %v1209, %v1218
        %v1221 = vmul.f32 %v1211, %v1219
        %v1222 = vpack.c.bf16 %v1221, %v1220
        %1223 = vrot.lane.b32.xlu0 %v903, 96
        %v1224 = vpop.permute.xlu0 %1223
        %v1227 = vsel %vm904, %v1222, 0
        %1229 = vmatprep.subr.bf16.mxu0 0
        %1230 = vmatpush1.bf16.msra.mxu0 %v1224
        %1231 = vmatprep.subr.bf16.mxu0 0
        %1232 = vmatpush1.bf16.msra.mxu0 0
        %1233 = vmatprep.subr.bf16.mxu0 0
        %1234 = vmatpush1.bf16.msra.mxu0 0
        %1235 = vmatprep.subr.bf16.mxu0 0
        %1236 = vmatpush1.bf16.msra.mxu0 0
        %1237 = vmatprep.subr.bf16.mxu0 0
        %1238 = vmatpush1.bf16.msra.mxu0 0
        %1239 = vmatprep.subr.bf16.mxu0 0
        %1240 = vmatpush1.bf16.msra.mxu0 0
        %1241 = vmatprep.subr.bf16.mxu0 0
        %1242 = vmatpush1.bf16.msra.mxu0 0
        %1243 = vmatprep.subr.bf16.mxu0 0
        %1244 = vmatpush1.bf16.msra.mxu0 0
        %1245 = vmatprep.subr.bf16.mxu0 0
        %1246 = vmatpush1.bf16.msra.mxu0 0
        %1247 = vmatprep.subr.bf16.mxu0 0
        %1248 = vmatpush1.bf16.msra.mxu0 0
        %1249 = vmatprep.subr.bf16.mxu0 0
        %1250 = vmatpush1.bf16.msra.mxu0 0
        %1251 = vmatprep.subr.bf16.mxu0 0
        %1252 = vmatpush1.bf16.msra.mxu0 0
        %1253 = vmatprep.subr.bf16.mxu0 0
        %1254 = vmatpush1.bf16.msra.mxu0 0
        %1255 = vmatprep.subr.bf16.mxu0 0
        %1256 = vmatpush1.bf16.msra.mxu0 0
        %1257 = vmatprep.subr.bf16.mxu0 0
        %1258 = vmatpush1.bf16.msra.mxu0 0
        %1259 = vmatprep.subr.bf16.mxu0 0
        %1260 = vmatpush1.bf16.msra.mxu0 0
        %1261 = vmatprep.mubr.bf16.mxu0 0
        %1262 = vmatmul.mubr.bf16.gmra.mrb[0].mxu0 %v1227
        %v1263 = vpop.f32.mrb[0].mxu0
        %v1264 = vadd.f32 0.0, %v1263
        %v1265 = vpop.f32.mrb[0].mxu0
        %v1266 = vpop.f32.mrb[0].mxu0
        %v1267 = vadd.f32 0.0, %v1266
        %v1268 = vpop.f32.mrb[0].mxu0
        %1269 = vdwg.mxu0
        %1270 = vrot.lane.b32.xlu0 %v901, 80
        %v1271 = vpop.permute.xlu0 %1270
        %1272 = vrot.lane.b32.xlu0 %v902, 80
        %v1273 = vpop.permute.xlu0 %1272
        %v1275 = vsel %vm904, %v1271, 0
        %v1278 = vsel %vm904, %v1273, 0
        %1280 = vmatprep.subr.bf16.mxu0 0
        %1281 = vmatpush1.bf16.xpose.msra.mxu0 %v1278
        %1282 = vmatprep.subr.bf16.mxu0 0
        %1283 = vmatpush1.bf16.xpose.msra.mxu0 0
        %1284 = vmatprep.subr.bf16.mxu0 0
        %1285 = vmatpush1.bf16.xpose.msra.mxu0 0
        %1286 = vmatprep.subr.bf16.mxu0 0
        %1287 = vmatpush1.bf16.xpose.msra.mxu0 0
        %1288 = vmatprep.subr.bf16.mxu0 0
        %1289 = vmatpush1.bf16.xpose.msra.mxu0 0
        %1290 = vmatprep.subr.bf16.mxu0 0
        %1291 = vmatpush1.bf16.xpose.msra.mxu0 0
        %1292 = vmatprep.subr.bf16.mxu0 0
        %1293 = vmatpush1.bf16.xpose.msra.mxu0 0
        %1294 = vmatprep.subr.bf16.mxu0 0
        %1295 = vmatpush1.bf16.xpose.msra.mxu0 0
        %1296 = vmatprep.subr.bf16.mxu0 0
        %1297 = vmatpush1.bf16.xpose.msra.mxu0 0
        %1298 = vmatprep.subr.bf16.mxu0 0
        %1299 = vmatpush1.bf16.xpose.msra.mxu0 0
        %1300 = vmatprep.subr.bf16.mxu0 0
        %1301 = vmatpush1.bf16.xpose.msra.mxu0 0
        %1302 = vmatprep.subr.bf16.mxu0 0
        %1303 = vmatpush1.bf16.xpose.msra.mxu0 0
        %1304 = vmatprep.subr.bf16.mxu0 0
        %1305 = vmatpush1.bf16.xpose.msra.mxu0 0
        %1306 = vmatprep.subr.bf16.mxu0 0
        %1307 = vmatpush1.bf16.xpose.msra.mxu0 0
        %1308 = vmatprep.subr.bf16.mxu0 0
        %1309 = vmatpush1.bf16.xpose.msra.mxu0 0
        %1310 = vmatprep.subr.bf16.mxu0 0
        %1311 = vmatpush1.bf16.xpose.msra.mxu0 0
        %1312 = vmatprep.mubr.bf16.mxu0 0
        %1313 = vmatmul.mubr.bf16.gmra.mrb[0].mxu0 %v1275
        %v1314 = vpop.f32.mrb[0].mxu0
        %v1315 = vadd.f32 0.0, %v1314
        %v1316 = vpop.f32.mrb[0].mxu0
        %v1317 = vpop.f32.mrb[0].mxu0
        %v1318 = vadd.f32 0.0, %v1317
        %v1319 = vpop.f32.mrb[0].mxu0
        %1320 = vdwg.mxu0
        %v1321 = vmul.f32 %v1315, 0.25
        %v1322 = vmul.f32 %v1318, 0.25
        %v1323 = vsel %vm904, %v1321, -inf
        %1324 = vmax.xlane.f32.xlu0 %v1323
        %v1325 = vpop.xlane.xlu0 %1324
        %v1326 = vsel %vm904, %v1322, -inf
        %1327 = vmax.xlane.f32.xlu0 %v1326
        %v1328 = vpop.xlane.xlu0 %1327
        %v1329 = vsub.f32 %v1321, %v1325
        %v1330 = vsub.f32 %v1322, %v1328
        %v1331 = vmul.f32 %v1329, 1.442695
        %v1332 = vpow.pop %v1331
        %v1333 = vmul.f32 %v1330, 1.442695
        %v1334 = vpow.pop %v1333
        %v1335 = vsel %vm904, %v1332, 0.0
        %1336 = vadd.xlane.f32.xlu0 %v1335
        %v1337 = vpop.xlane.xlu0 %1336
        %v1338 = vsel %vm904, %v1334, 0.0
        %1339 = vadd.xlane.f32.xlu0 %v1338
        %v1340 = vpop.xlane.xlu0 %1339
        %v1341 = vrcp.pop %v1337
        %v1342 = vrcp.pop %v1340
        %v1343 = vmul.f32 %v1332, %v1341
        %v1344 = vmul.f32 %v1334, %v1342
        %v1345 = vpack.c.bf16 %v1344, %v1343
        %1346 = vrot.lane.b32.xlu0 %v903, 80
        %v1347 = vpop.permute.xlu0 %1346
        %v1350 = vsel %vm904, %v1345, 0
        %1352 = vmatprep.subr.bf16.mxu0 0
        %1353 = vmatpush1.bf16.msra.mxu0 %v1347
        %1354 = vmatprep.subr.bf16.mxu0 0
        %1355 = vmatpush1.bf16.msra.mxu0 0
        %1356 = vmatprep.subr.bf16.mxu0 0
        %1357 = vmatpush1.bf16.msra.mxu0 0
        %1358 = vmatprep.subr.bf16.mxu0 0
        %1359 = vmatpush1.bf16.msra.mxu0 0
        %1360 = vmatprep.subr.bf16.mxu0 0
        %1361 = vmatpush1.bf16.msra.mxu0 0
        %1362 = vmatprep.subr.bf16.mxu0 0
        %1363 = vmatpush1.bf16.msra.mxu0 0
        %1364 = vmatprep.subr.bf16.mxu0 0
        %1365 = vmatpush1.bf16.msra.mxu0 0
        %1366 = vmatprep.subr.bf16.mxu0 0
        %1367 = vmatpush1.bf16.msra.mxu0 0
        %1368 = vmatprep.subr.bf16.mxu0 0
        %1369 = vmatpush1.bf16.msra.mxu0 0
        %1370 = vmatprep.subr.bf16.mxu0 0
        %1371 = vmatpush1.bf16.msra.mxu0 0
        %1372 = vmatprep.subr.bf16.mxu0 0
        %1373 = vmatpush1.bf16.msra.mxu0 0
        %1374 = vmatprep.subr.bf16.mxu0 0
        %1375 = vmatpush1.bf16.msra.mxu0 0
        %1376 = vmatprep.subr.bf16.mxu0 0
        %1377 = vmatpush1.bf16.msra.mxu0 0
        %1378 = vmatprep.subr.bf16.mxu0 0
        %1379 = vmatpush1.bf16.msra.mxu0 0
        %1380 = vmatprep.subr.bf16.mxu0 0
        %1381 = vmatpush1.bf16.msra.mxu0 0
        %1382 = vmatprep.subr.bf16.mxu0 0
        %1383 = vmatpush1.bf16.msra.mxu0 0
        %1384 = vmatprep.mubr.bf16.mxu0 0
        %1385 = vmatmul.mubr.bf16.gmra.mrb[0].mxu0 %v1350
        %v1386 = vpop.f32.mrb[0].mxu0
        %v1387 = vadd.f32 0.0, %v1386
        %v1388 = vpop.f32.mrb[0].mxu0
        %v1389 = vpop.f32.mrb[0].mxu0
        %v1390 = vadd.f32 0.0, %v1389
        %v1391 = vpop.f32.mrb[0].mxu0
        %1392 = vdwg.mxu0
        %1393 = vrot.lane.b32.xlu0 %v901, 64
        %v1394 = vpop.permute.xlu0 %1393
        %1395 = vrot.lane.b32.xlu0 %v902, 64
        %v1396 = vpop.permute.xlu0 %1395
        %v1398 = vsel %vm904, %v1394, 0
        %v1401 = vsel %vm904, %v1396, 0
        %1403 = vmatprep.subr.bf16.mxu0 0
        %1404 = vmatpush1.bf16.xpose.msra.mxu0 %v1401
        %1405 = vmatprep.subr.bf16.mxu0 0
        %1406 = vmatpush1.bf16.xpose.msra.mxu0 0
        %1407 = vmatprep.subr.bf16.mxu0 0
        %1408 = vmatpush1.bf16.xpose.msra.mxu0 0
        %1409 = vmatprep.subr.bf16.mxu0 0
        %1410 = vmatpush1.bf16.xpose.msra.mxu0 0
        %1411 = vmatprep.subr.bf16.mxu0 0
        %1412 = vmatpush1.bf16.xpose.msra.mxu0 0
        %1413 = vmatprep.subr.bf16.mxu0 0
        %1414 = vmatpush1.bf16.xpose.msra.mxu0 0
        %1415 = vmatprep.subr.bf16.mxu0 0
        %1416 = vmatpush1.bf16.xpose.msra.mxu0 0
        %1417 = vmatprep.subr.bf16.mxu0 0
        %1418 = vmatpush1.bf16.xpose.msra.mxu0 0
        %1419 = vmatprep.subr.bf16.mxu0 0
        %1420 = vmatpush1.bf16.xpose.msra.mxu0 0
        %1421 = vmatprep.subr.bf16.mxu0 0
        %1422 = vmatpush1.bf16.xpose.msra.mxu0 0
        %1423 = vmatprep.subr.bf16.mxu0 0
        %1424 = vmatpush1.bf16.xpose.msra.mxu0 0
        %1425 = vmatprep.subr.bf16.mxu0 0
        %1426 = vmatpush1.bf16.xpose.msra.mxu0 0
        %1427 = vmatprep.subr.bf16.mxu0 0
        %1428 = vmatpush1.bf16.xpose.msra.mxu0 0
        %1429 = vmatprep.subr.bf16.mxu0 0
        %1430 = vmatpush1.bf16.xpose.msra.mxu0 0
        %1431 = vmatprep.subr.bf16.mxu0 0
        %1432 = vmatpush1.bf16.xpose.msra.mxu0 0
        %1433 = vmatprep.subr.bf16.mxu0 0
        %1434 = vmatpush1.bf16.xpose.msra.mxu0 0
        %1435 = vmatprep.mubr.bf16.mxu0 0
        %1436 = vmatmul.mubr.bf16.gmra.mrb[0].mxu0 %v1398
        %v1437 = vpop.f32.mrb[0].mxu0
        %v1438 = vadd.f32 0.0, %v1437
        %v1439 = vpop.f32.mrb[0].mxu0
        %v1440 = vpop.f32.mrb[0].mxu0
        %v1441 = vadd.f32 0.0, %v1440
        %v1442 = vpop.f32.mrb[0].mxu0
        %1443 = vdwg.mxu0
        %v1444 = vmul.f32 %v1438, 0.25
        %v1445 = vmul.f32 %v1441, 0.25
        %v1446 = vsel %vm904, %v1444, -inf
        %1447 = vmax.xlane.f32.xlu0 %v1446
        %v1448 = vpop.xlane.xlu0 %1447
        %v1449 = vsel %vm904, %v1445, -inf
        %1450 = vmax.xlane.f32.xlu0 %v1449
        %v1451 = vpop.xlane.xlu0 %1450
        %v1452 = vsub.f32 %v1444, %v1448
        %v1453 = vsub.f32 %v1445, %v1451
        %v1454 = vmul.f32 %v1452, 1.442695
        %v1455 = vpow.pop %v1454
        %v1456 = vmul.f32 %v1453, 1.442695
        %v1457 = vpow.pop %v1456
        %v1458 = vsel %vm904, %v1455, 0.0
        %1459 = vadd.xlane.f32.xlu0 %v1458
        %v1460 = vpop.xlane.xlu0 %1459
        %v1461 = vsel %vm904, %v1457, 0.0
        %1462 = vadd.xlane.f32.xlu0 %v1461
        %v1463 = vpop.xlane.xlu0 %1462
        %v1464 = vrcp.pop %v1460
        %v1465 = vrcp.pop %v1463
        %v1466 = vmul.f32 %v1455, %v1464
        %v1467 = vmul.f32 %v1457, %v1465
        %v1468 = vpack.c.bf16 %v1467, %v1466
        %1469 = vrot.lane.b32.xlu0 %v903, 64
        %v1470 = vpop.permute.xlu0 %1469
        %v1473 = vsel %vm904, %v1468, 0
        %1475 = vmatprep.subr.bf16.mxu0 0
        %1476 = vmatpush1.bf16.msra.mxu0 %v1470
        %1477 = vmatprep.subr.bf16.mxu0 0
        %1478 = vmatpush1.bf16.msra.mxu0 0
        %1479 = vmatprep.subr.bf16.mxu0 0
        %1480 = vmatpush1.bf16.msra.mxu0 0
        %1481 = vmatprep.subr.bf16.mxu0 0
        %1482 = vmatpush1.bf16.msra.mxu0 0
        %1483 = vmatprep.subr.bf16.mxu0 0
        %1484 = vmatpush1.bf16.msra.mxu0 0
        %1485 = vmatprep.subr.bf16.mxu0 0
        %1486 = vmatpush1.bf16.msra.mxu0 0
        %1487 = vmatprep.subr.bf16.mxu0 0
        %1488 = vmatpush1.bf16.msra.mxu0 0
        %1489 = vmatprep.subr.bf16.mxu0 0
        %1490 = vmatpush1.bf16.msra.mxu0 0
        %1491 = vmatprep.subr.bf16.mxu0 0
        %1492 = vmatpush1.bf16.msra.mxu0 0
        %1493 = vmatprep.subr.bf16.mxu0 0
        %1494 = vmatpush1.bf16.msra.mxu0 0
        %1495 = vmatprep.subr.bf16.mxu0 0
        %1496 = vmatpush1.bf16.msra.mxu0 0
        %1497 = vmatprep.subr.bf16.mxu0 0
        %1498 = vmatpush1.bf16.msra.mxu0 0
        %1499 = vmatprep.subr.bf16.mxu0 0
        %1500 = vmatpush1.bf16.msra.mxu0 0
        %1501 = vmatprep.subr.bf16.mxu0 0
        %1502 = vmatpush1.bf16.msra.mxu0 0
        %1503 = vmatprep.subr.bf16.mxu0 0
        %1504 = vmatpush1.bf16.msra.mxu0 0
        %1505 = vmatprep.subr.bf16.mxu0 0
        %1506 = vmatpush1.bf16.msra.mxu0 0
        %1507 = vmatprep.mubr.bf16.mxu0 0
        %1508 = vmatmul.mubr.bf16.gmra.mrb[0].mxu0 %v1473
        %v1509 = vpop.f32.mrb[0].mxu0
        %v1510 = vadd.f32 0.0, %v1509
        %v1511 = vpop.f32.mrb[0].mxu0
        %v1512 = vpop.f32.mrb[0].mxu0
        %v1513 = vadd.f32 0.0, %v1512
        %v1514 = vpop.f32.mrb[0].mxu0
        %1515 = vdwg.mxu0
        %1516 = vrot.lane.b32.xlu0 %v901, 48
        %v1517 = vpop.permute.xlu0 %1516
        %1518 = vrot.lane.b32.xlu0 %v902, 48
        %v1519 = vpop.permute.xlu0 %1518
        %v1521 = vsel %vm904, %v1517, 0
        %v1524 = vsel %vm904, %v1519, 0
        %1526 = vmatprep.subr.bf16.mxu0 0
        %1527 = vmatpush1.bf16.xpose.msra.mxu0 %v1524
        %1528 = vmatprep.subr.bf16.mxu0 0
        %1529 = vmatpush1.bf16.xpose.msra.mxu0 0
        %1530 = vmatprep.subr.bf16.mxu0 0
        %1531 = vmatpush1.bf16.xpose.msra.mxu0 0
        %1532 = vmatprep.subr.bf16.mxu0 0
        %1533 = vmatpush1.bf16.xpose.msra.mxu0 0
        %1534 = vmatprep.subr.bf16.mxu0 0
        %1535 = vmatpush1.bf16.xpose.msra.mxu0 0
        %1536 = vmatprep.subr.bf16.mxu0 0
        %1537 = vmatpush1.bf16.xpose.msra.mxu0 0
        %1538 = vmatprep.subr.bf16.mxu0 0
        %1539 = vmatpush1.bf16.xpose.msra.mxu0 0
        %1540 = vmatprep.subr.bf16.mxu0 0
        %1541 = vmatpush1.bf16.xpose.msra.mxu0 0
        %1542 = vmatprep.subr.bf16.mxu0 0
        %1543 = vmatpush1.bf16.xpose.msra.mxu0 0
        %1544 = vmatprep.subr.bf16.mxu0 0
        %1545 = vmatpush1.bf16.xpose.msra.mxu0 0
        %1546 = vmatprep.subr.bf16.mxu0 0
        %1547 = vmatpush1.bf16.xpose.msra.mxu0 0
        %1548 = vmatprep.subr.bf16.mxu0 0
        %1549 = vmatpush1.bf16.xpose.msra.mxu0 0
        %1550 = vmatprep.subr.bf16.mxu0 0
        %1551 = vmatpush1.bf16.xpose.msra.mxu0 0
        %1552 = vmatprep.subr.bf16.mxu0 0
        %1553 = vmatpush1.bf16.xpose.msra.mxu0 0
        %1554 = vmatprep.subr.bf16.mxu0 0
        %1555 = vmatpush1.bf16.xpose.msra.mxu0 0
        %1556 = vmatprep.subr.bf16.mxu0 0
        %1557 = vmatpush1.bf16.xpose.msra.mxu0 0
        %1558 = vmatprep.mubr.bf16.mxu0 0
        %1559 = vmatmul.mubr.bf16.gmra.mrb[0].mxu0 %v1521
        %v1560 = vpop.f32.mrb[0].mxu0
        %v1561 = vadd.f32 0.0, %v1560
        %v1562 = vpop.f32.mrb[0].mxu0
        %v1563 = vpop.f32.mrb[0].mxu0
        %v1564 = vadd.f32 0.0, %v1563
        %v1565 = vpop.f32.mrb[0].mxu0
        %1566 = vdwg.mxu0
        %v1567 = vmul.f32 %v1561, 0.25
        %v1568 = vmul.f32 %v1564, 0.25
        %v1569 = vsel %vm904, %v1567, -inf
        %1570 = vmax.xlane.f32.xlu0 %v1569
        %v1571 = vpop.xlane.xlu0 %1570
        %v1572 = vsel %vm904, %v1568, -inf
        %1573 = vmax.xlane.f32.xlu0 %v1572
        %v1574 = vpop.xlane.xlu0 %1573
        %v1575 = vsub.f32 %v1567, %v1571
        %v1576 = vsub.f32 %v1568, %v1574
        %v1577 = vmul.f32 %v1575, 1.442695
        %v1578 = vpow.pop %v1577
        %v1579 = vmul.f32 %v1576, 1.442695
        %v1580 = vpow.pop %v1579
        %v1581 = vsel %vm904, %v1578, 0.0
        %1582 = vadd.xlane.f32.xlu0 %v1581
        %v1583 = vpop.xlane.xlu0 %1582
        %v1584 = vsel %vm904, %v1580, 0.0
        %1585 = vadd.xlane.f32.xlu0 %v1584
        %v1586 = vpop.xlane.xlu0 %1585
        %v1587 = vrcp.pop %v1583
        %v1588 = vrcp.pop %v1586
        %v1589 = vmul.f32 %v1578, %v1587
        %v1590 = vmul.f32 %v1580, %v1588
        %v1591 = vpack.c.bf16 %v1590, %v1589
        %1592 = vrot.lane.b32.xlu0 %v903, 48
        %v1593 = vpop.permute.xlu0 %1592
        %v1596 = vsel %vm904, %v1591, 0
        %1598 = vmatprep.subr.bf16.mxu0 0
        %1599 = vmatpush1.bf16.msra.mxu0 %v1593
        %1600 = vmatprep.subr.bf16.mxu0 0
        %1601 = vmatpush1.bf16.msra.mxu0 0
        %1602 = vmatprep.subr.bf16.mxu0 0
        %1603 = vmatpush1.bf16.msra.mxu0 0
        %1604 = vmatprep.subr.bf16.mxu0 0
        %1605 = vmatpush1.bf16.msra.mxu0 0
        %1606 = vmatprep.subr.bf16.mxu0 0
        %1607 = vmatpush1.bf16.msra.mxu0 0
        %1608 = vmatprep.subr.bf16.mxu0 0
        %1609 = vmatpush1.bf16.msra.mxu0 0
        %1610 = vmatprep.subr.bf16.mxu0 0
        %1611 = vmatpush1.bf16.msra.mxu0 0
        %1612 = vmatprep.subr.bf16.mxu0 0
        %1613 = vmatpush1.bf16.msra.mxu0 0
        %1614 = vmatprep.subr.bf16.mxu0 0
        %1615 = vmatpush1.bf16.msra.mxu0 0
        %1616 = vmatprep.subr.bf16.mxu0 0
        %1617 = vmatpush1.bf16.msra.mxu0 0
        %1618 = vmatprep.subr.bf16.mxu0 0
        %1619 = vmatpush1.bf16.msra.mxu0 0
        %1620 = vmatprep.subr.bf16.mxu0 0
        %1621 = vmatpush1.bf16.msra.mxu0 0
        %1622 = vmatprep.subr.bf16.mxu0 0
        %1623 = vmatpush1.bf16.msra.mxu0 0
        %1624 = vmatprep.subr.bf16.mxu0 0
        %1625 = vmatpush1.bf16.msra.mxu0 0
        %1626 = vmatprep.subr.bf16.mxu0 0
        %1627 = vmatpush1.bf16.msra.mxu0 0
        %1628 = vmatprep.subr.bf16.mxu0 0
        %1629 = vmatpush1.bf16.msra.mxu0 0
        %1630 = vmatprep.mubr.bf16.mxu0 0
        %1631 = vmatmul.mubr.bf16.gmra.mrb[0].mxu0 %v1596
        %v1632 = vpop.f32.mrb[0].mxu0
        %v1633 = vadd.f32 0.0, %v1632
        %v1634 = vpop.f32.mrb[0].mxu0
        %v1635 = vpop.f32.mrb[0].mxu0
        %v1636 = vadd.f32 0.0, %v1635
        %v1637 = vpop.f32.mrb[0].mxu0
        %1638 = vdwg.mxu0
        %1639 = vrot.lane.b32.xlu0 %v901, 32
        %v1640 = vpop.permute.xlu0 %1639
        %1641 = vrot.lane.b32.xlu0 %v902, 32
        %v1642 = vpop.permute.xlu0 %1641
        %v1644 = vsel %vm904, %v1640, 0
        %v1647 = vsel %vm904, %v1642, 0
        %1649 = vmatprep.subr.bf16.mxu0 0
        %1650 = vmatpush1.bf16.xpose.msra.mxu0 %v1647
        %1651 = vmatprep.subr.bf16.mxu0 0
        %1652 = vmatpush1.bf16.xpose.msra.mxu0 0
        %1653 = vmatprep.subr.bf16.mxu0 0
        %1654 = vmatpush1.bf16.xpose.msra.mxu0 0
        %1655 = vmatprep.subr.bf16.mxu0 0
        %1656 = vmatpush1.bf16.xpose.msra.mxu0 0
        %1657 = vmatprep.subr.bf16.mxu0 0
        %1658 = vmatpush1.bf16.xpose.msra.mxu0 0
        %1659 = vmatprep.subr.bf16.mxu0 0
        %1660 = vmatpush1.bf16.xpose.msra.mxu0 0
        %1661 = vmatprep.subr.bf16.mxu0 0
        %1662 = vmatpush1.bf16.xpose.msra.mxu0 0
        %1663 = vmatprep.subr.bf16.mxu0 0
        %1664 = vmatpush1.bf16.xpose.msra.mxu0 0
        %1665 = vmatprep.subr.bf16.mxu0 0
        %1666 = vmatpush1.bf16.xpose.msra.mxu0 0
        %1667 = vmatprep.subr.bf16.mxu0 0
        %1668 = vmatpush1.bf16.xpose.msra.mxu0 0
        %1669 = vmatprep.subr.bf16.mxu0 0
        %1670 = vmatpush1.bf16.xpose.msra.mxu0 0
        %1671 = vmatprep.subr.bf16.mxu0 0
        %1672 = vmatpush1.bf16.xpose.msra.mxu0 0
        %1673 = vmatprep.subr.bf16.mxu0 0
        %1674 = vmatpush1.bf16.xpose.msra.mxu0 0
        %1675 = vmatprep.subr.bf16.mxu0 0
        %1676 = vmatpush1.bf16.xpose.msra.mxu0 0
        %1677 = vmatprep.subr.bf16.mxu0 0
        %1678 = vmatpush1.bf16.xpose.msra.mxu0 0
        %1679 = vmatprep.subr.bf16.mxu0 0
        %1680 = vmatpush1.bf16.xpose.msra.mxu0 0
        %1681 = vmatprep.mubr.bf16.mxu0 0
        %1682 = vmatmul.mubr.bf16.gmra.mrb[0].mxu0 %v1644
        %v1683 = vpop.f32.mrb[0].mxu0
        %v1684 = vadd.f32 0.0, %v1683
        %v1685 = vpop.f32.mrb[0].mxu0
        %v1686 = vpop.f32.mrb[0].mxu0
        %v1687 = vadd.f32 0.0, %v1686
        %v1688 = vpop.f32.mrb[0].mxu0
        %1689 = vdwg.mxu0
        %v1690 = vmul.f32 %v1684, 0.25
        %v1691 = vmul.f32 %v1687, 0.25
        %v1692 = vsel %vm904, %v1690, -inf
        %1693 = vmax.xlane.f32.xlu0 %v1692
        %v1694 = vpop.xlane.xlu0 %1693
        %v1695 = vsel %vm904, %v1691, -inf
        %1696 = vmax.xlane.f32.xlu0 %v1695
        %v1697 = vpop.xlane.xlu0 %1696
        %v1698 = vsub.f32 %v1690, %v1694
        %v1699 = vsub.f32 %v1691, %v1697
        %v1700 = vmul.f32 %v1698, 1.442695
        %v1701 = vpow.pop %v1700
        %v1702 = vmul.f32 %v1699, 1.442695
        %v1703 = vpow.pop %v1702
        %v1704 = vsel %vm904, %v1701, 0.0
        %1705 = vadd.xlane.f32.xlu0 %v1704
        %v1706 = vpop.xlane.xlu0 %1705
        %v1707 = vsel %vm904, %v1703, 0.0
        %1708 = vadd.xlane.f32.xlu0 %v1707
        %v1709 = vpop.xlane.xlu0 %1708
        %v1710 = vrcp.pop %v1706
        %v1711 = vrcp.pop %v1709
        %v1712 = vmul.f32 %v1701, %v1710
        %v1713 = vmul.f32 %v1703, %v1711
        %v1714 = vpack.c.bf16 %v1713, %v1712
        %1715 = vrot.lane.b32.xlu0 %v903, 32
        %v1716 = vpop.permute.xlu0 %1715
        %v1719 = vsel %vm904, %v1714, 0
        %1721 = vmatprep.subr.bf16.mxu0 0
        %1722 = vmatpush1.bf16.msra.mxu0 %v1716
        %1723 = vmatprep.subr.bf16.mxu0 0
        %1724 = vmatpush1.bf16.msra.mxu0 0
        %1725 = vmatprep.subr.bf16.mxu0 0
        %1726 = vmatpush1.bf16.msra.mxu0 0
        %1727 = vmatprep.subr.bf16.mxu0 0
        %1728 = vmatpush1.bf16.msra.mxu0 0
        %1729 = vmatprep.subr.bf16.mxu0 0
        %1730 = vmatpush1.bf16.msra.mxu0 0
        %1731 = vmatprep.subr.bf16.mxu0 0
        %1732 = vmatpush1.bf16.msra.mxu0 0
        %1733 = vmatprep.subr.bf16.mxu0 0
        %1734 = vmatpush1.bf16.msra.mxu0 0
        %1735 = vmatprep.subr.bf16.mxu0 0
        %1736 = vmatpush1.bf16.msra.mxu0 0
        %1737 = vmatprep.subr.bf16.mxu0 0
        %1738 = vmatpush1.bf16.msra.mxu0 0
        %1739 = vmatprep.subr.bf16.mxu0 0
        %1740 = vmatpush1.bf16.msra.mxu0 0
        %1741 = vmatprep.subr.bf16.mxu0 0
        %1742 = vmatpush1.bf16.msra.mxu0 0
        %1743 = vmatprep.subr.bf16.mxu0 0
        %1744 = vmatpush1.bf16.msra.mxu0 0
        %1745 = vmatprep.subr.bf16.mxu0 0
        %1746 = vmatpush1.bf16.msra.mxu0 0
        %1747 = vmatprep.subr.bf16.mxu0 0
        %1748 = vmatpush1.bf16.msra.mxu0 0
        %1749 = vmatprep.subr.bf16.mxu0 0
        %1750 = vmatpush1.bf16.msra.mxu0 0
        %1751 = vmatprep.subr.bf16.mxu0 0
        %1752 = vmatpush1.bf16.msra.mxu0 0
        %1753 = vmatprep.mubr.bf16.mxu0 0
        %1754 = vmatmul.mubr.bf16.gmra.mrb[0].mxu0 %v1719
        %v1755 = vpop.f32.mrb[0].mxu0
        %v1756 = vadd.f32 0.0, %v1755
        %v1757 = vpop.f32.mrb[0].mxu0
        %v1758 = vpop.f32.mrb[0].mxu0
        %v1759 = vadd.f32 0.0, %v1758
        %v1760 = vpop.f32.mrb[0].mxu0
        %1761 = vdwg.mxu0
        %1762 = vrot.lane.b32.xlu0 %v901, 16
        %v1763 = vpop.permute.xlu0 %1762
        %1764 = vrot.lane.b32.xlu0 %v902, 16
        %v1765 = vpop.permute.xlu0 %1764
        %v1767 = vsel %vm904, %v1763, 0
        %v1770 = vsel %vm904, %v1765, 0
        %1772 = vmatprep.subr.bf16.mxu0 0
        %1773 = vmatpush1.bf16.xpose.msra.mxu0 %v1770
        %1774 = vmatprep.subr.bf16.mxu0 0
        %1775 = vmatpush1.bf16.xpose.msra.mxu0 0
        %1776 = vmatprep.subr.bf16.mxu0 0
        %1777 = vmatpush1.bf16.xpose.msra.mxu0 0
        %1778 = vmatprep.subr.bf16.mxu0 0
        %1779 = vmatpush1.bf16.xpose.msra.mxu0 0
        %1780 = vmatprep.subr.bf16.mxu0 0
        %1781 = vmatpush1.bf16.xpose.msra.mxu0 0
        %1782 = vmatprep.subr.bf16.mxu0 0
        %1783 = vmatpush1.bf16.xpose.msra.mxu0 0
        %1784 = vmatprep.subr.bf16.mxu0 0
        %1785 = vmatpush1.bf16.xpose.msra.mxu0 0
        %1786 = vmatprep.subr.bf16.mxu0 0
        %1787 = vmatpush1.bf16.xpose.msra.mxu0 0
        %1788 = vmatprep.subr.bf16.mxu0 0
        %1789 = vmatpush1.bf16.xpose.msra.mxu0 0
        %1790 = vmatprep.subr.bf16.mxu0 0
        %1791 = vmatpush1.bf16.xpose.msra.mxu0 0
        %1792 = vmatprep.subr.bf16.mxu0 0
        %1793 = vmatpush1.bf16.xpose.msra.mxu0 0
        %1794 = vmatprep.subr.bf16.mxu0 0
        %1795 = vmatpush1.bf16.xpose.msra.mxu0 0
        %1796 = vmatprep.subr.bf16.mxu0 0
        %1797 = vmatpush1.bf16.xpose.msra.mxu0 0
        %1798 = vmatprep.subr.bf16.mxu0 0
        %1799 = vmatpush1.bf16.xpose.msra.mxu0 0
        %1800 = vmatprep.subr.bf16.mxu0 0
        %1801 = vmatpush1.bf16.xpose.msra.mxu0 0
        %1802 = vmatprep.subr.bf16.mxu0 0
        %1803 = vmatpush1.bf16.xpose.msra.mxu0 0
        %1804 = vmatprep.mubr.bf16.mxu0 0
        %1805 = vmatmul.mubr.bf16.gmra.mrb[0].mxu0 %v1767
        %v1806 = vpop.f32.mrb[0].mxu0
        %v1807 = vadd.f32 0.0, %v1806
        %v1808 = vpop.f32.mrb[0].mxu0
        %v1809 = vpop.f32.mrb[0].mxu0
        %v1810 = vadd.f32 0.0, %v1809
        %v1811 = vpop.f32.mrb[0].mxu0
        %1812 = vdwg.mxu0
        %v1813 = vmul.f32 %v1807, 0.25
        %v1814 = vmul.f32 %v1810, 0.25
        %v1815 = vsel %vm904, %v1813, -inf
        %1816 = vmax.xlane.f32.xlu0 %v1815
        %v1817 = vpop.xlane.xlu0 %1816
        %v1818 = vsel %vm904, %v1814, -inf
        %1819 = vmax.xlane.f32.xlu0 %v1818
        %v1820 = vpop.xlane.xlu0 %1819
        %v1821 = vsub.f32 %v1813, %v1817
        %v1822 = vsub.f32 %v1814, %v1820
        %v1823 = vmul.f32 %v1821, 1.442695
        %v1824 = vpow.pop %v1823
        %v1825 = vmul.f32 %v1822, 1.442695
        %v1826 = vpow.pop %v1825
        %v1827 = vsel %vm904, %v1824, 0.0
        %1828 = vadd.xlane.f32.xlu0 %v1827
        %v1829 = vpop.xlane.xlu0 %1828
        %v1830 = vsel %vm904, %v1826, 0.0
        %1831 = vadd.xlane.f32.xlu0 %v1830
        %v1832 = vpop.xlane.xlu0 %1831
        %v1833 = vrcp.pop %v1829
        %v1834 = vrcp.pop %v1832
        %v1835 = vmul.f32 %v1824, %v1833
        %v1836 = vmul.f32 %v1826, %v1834
        %v1837 = vpack.c.bf16 %v1836, %v1835
        %1838 = vrot.lane.b32.xlu0 %v903, 16
        %v1839 = vpop.permute.xlu0 %1838
        %v1842 = vsel %vm904, %v1837, 0
        %1844 = vmatprep.subr.bf16.mxu0 0
        %1845 = vmatpush1.bf16.msra.mxu0 %v1839
        %1846 = vmatprep.subr.bf16.mxu0 0
        %1847 = vmatpush1.bf16.msra.mxu0 0
        %1848 = vmatprep.subr.bf16.mxu0 0
        %1849 = vmatpush1.bf16.msra.mxu0 0
        %1850 = vmatprep.subr.bf16.mxu0 0
        %1851 = vmatpush1.bf16.msra.mxu0 0
        %1852 = vmatprep.subr.bf16.mxu0 0
        %1853 = vmatpush1.bf16.msra.mxu0 0
        %1854 = vmatprep.subr.bf16.mxu0 0
        %1855 = vmatpush1.bf16.msra.mxu0 0
        %1856 = vmatprep.subr.bf16.mxu0 0
        %1857 = vmatpush1.bf16.msra.mxu0 0
        %1858 = vmatprep.subr.bf16.mxu0 0
        %1859 = vmatpush1.bf16.msra.mxu0 0
        %1860 = vmatprep.subr.bf16.mxu0 0
        %1861 = vmatpush1.bf16.msra.mxu0 0
        %1862 = vmatprep.subr.bf16.mxu0 0
        %1863 = vmatpush1.bf16.msra.mxu0 0
        %1864 = vmatprep.subr.bf16.mxu0 0
        %1865 = vmatpush1.bf16.msra.mxu0 0
        %1866 = vmatprep.subr.bf16.mxu0 0
        %1867 = vmatpush1.bf16.msra.mxu0 0
        %1868 = vmatprep.subr.bf16.mxu0 0
        %1869 = vmatpush1.bf16.msra.mxu0 0
        %1870 = vmatprep.subr.bf16.mxu0 0
        %1871 = vmatpush1.bf16.msra.mxu0 0
        %1872 = vmatprep.subr.bf16.mxu0 0
        %1873 = vmatpush1.bf16.msra.mxu0 0
        %1874 = vmatprep.subr.bf16.mxu0 0
        %1875 = vmatpush1.bf16.msra.mxu0 0
        %1876 = vmatprep.mubr.bf16.mxu0 0
        %1877 = vmatmul.mubr.bf16.gmra.mrb[0].mxu0 %v1842
        %v1878 = vpop.f32.mrb[0].mxu0
        %v1879 = vadd.f32 0.0, %v1878
        %v1880 = vpop.f32.mrb[0].mxu0
        %v1881 = vpop.f32.mrb[0].mxu0
        %v1882 = vadd.f32 0.0, %v1881
        %v1883 = vpop.f32.mrb[0].mxu0
        %1884 = vdwg.mxu0
        %1887 = vrot.lane.b32.xlu0 %v1141, 16
        %v1888 = vpop.permute.xlu0 %1887
        %1889 = vrot.lane.b32.xlu0 %v1144, 16
        %v1890 = vpop.permute.xlu0 %1889
        %1895 = vrot.lane.b32.xlu0 %v1264, 32
        %v1896 = vpop.permute.xlu0 %1895
        %1897 = vrot.lane.b32.xlu0 %v1267, 32
        %v1898 = vpop.permute.xlu0 %1897
        %1903 = vrot.lane.b32.xlu0 %v1387, 48
        %v1904 = vpop.permute.xlu0 %1903
        %1905 = vrot.lane.b32.xlu0 %v1390, 48
        %v1906 = vpop.permute.xlu0 %1905
        %1911 = vrot.lane.b32.xlu0 %v1510, 64
        %v1912 = vpop.permute.xlu0 %1911
        %1913 = vrot.lane.b32.xlu0 %v1513, 64
        %v1914 = vpop.permute.xlu0 %1913
        %1919 = vrot.lane.b32.xlu0 %v1633, 80
        %v1920 = vpop.permute.xlu0 %1919
        %1921 = vrot.lane.b32.xlu0 %v1636, 80
        %v1922 = vpop.permute.xlu0 %1921
        %1927 = vrot.lane.b32.xlu0 %v1756, 96
        %v1928 = vpop.permute.xlu0 %1927
        %1929 = vrot.lane.b32.xlu0 %v1759, 96
        %v1930 = vpop.permute.xlu0 %1929
        %1935 = vrot.lane.b32.xlu0 %v1879, 112
        %v1936 = vpop.permute.xlu0 %1935
        %1937 = vrot.lane.b32.xlu0 %v1882, 112
        %v1938 = vpop.permute.xlu0 %1937
        %v1941 = vsel %vm904, %v1015, %v1888
        %v1942 = vsel %vm904, %v1018, %v1890
        %vm1943 = vcmask 261120
        %v1944 = vsel %vm1943, %v1941, %v1896
        %v1945 = vsel %vm1943, %v1942, %v1898
        %vm1946 = vcmask 392192
        %v1947 = vsel %vm1946, %v1944, %v1904
        %v1948 = vsel %vm1946, %v1945, %v1906
        %vm1949 = vcmask 523264
        %v1950 = vsel %vm1949, %v1947, %v1912
        %v1951 = vsel %vm1949, %v1948, %v1914
        %vm1952 = vcmask 654336
        %v1953 = vsel %vm1952, %v1950, %v1920
        %v1954 = vsel %vm1952, %v1951, %v1922
        %vm1955 = vcmask 785408
        %v1956 = vsel %vm1955, %v1953, %v1928
        %v1957 = vsel %vm1955, %v1954, %v1930
        %vm1958 = vcmask 916480
        %v1959 = vsel %vm1958, %v1956, %v1936
        %v1960 = vsel %vm1958, %v1957, %v1938
        %v1961 = vpack.c.bf16 %v1960, %v1959
        %v1962 = vld [vmem:[#allocation13] sm:$0xf]
        %v1963 = vld [vmem:[#allocation13 + $0x4] sm:$0xf]
        %v1964 = vld [vmem:[#allocation13 + $0x8] sm:$0xf]
        %v1965 = vld [vmem:[#allocation13 + $0xc] sm:$0xf]
        %v1966 = vld [vmem:[#allocation13 + $0x10] sm:$0xf]
        %v1967 = vld [vmem:[#allocation13 + $0x14] sm:$0xf]
        %v1968 = vld [vmem:[#allocation13 + $0x18] sm:$0xf]
        %v1969 = vld [vmem:[#allocation13 + $0x1c] sm:$0xf]
        %v1970 = vld [vmem:[#allocation13 + $0x20] sm:$0xf]
        %v1971 = vld [vmem:[#allocation13 + $0x24] sm:$0xf]
        %v1972 = vld [vmem:[#allocation13 + $0x28] sm:$0xf]
        %v1973 = vld [vmem:[#allocation13 + $0x2c] sm:$0xf]
        %v1974 = vld [vmem:[#allocation13 + $0x30] sm:$0xf]
        %v1975 = vld [vmem:[#allocation13 + $0x34] sm:$0xf]
        %v1976 = vld [vmem:[#allocation13 + $0x38] sm:$0xf]
        %v1977 = vld [vmem:[#allocation13 + $0x3c] sm:$0xf]
        %v1978 = vld [vmem:[%s10] sm:$0x1]
        %v1980 = vlaneseq
        %v1981 = vshrl.u32 %v1980, 7
        %v1982 = vsub.s32 0, %v1981
        %v1983 = vrot.slane %v1978, %v1982
        %v2001 = vunpack.c.l.b16 %v1962
        %v2002 = vunpack.c.l.b16 %v1963
        %v2003 = vunpack.c.l.b16 %v1964
        %v2004 = vunpack.c.l.b16 %v1965
        %v2005 = vunpack.c.l.b16 %v1966
        %v2006 = vunpack.c.l.b16 %v1967
        %v2007 = vunpack.c.l.b16 %v1968
        %v2008 = vunpack.c.l.b16 %v1969
        %v2009 = vunpack.c.l.b16 %v1970
        %v2010 = vunpack.c.l.b16 %v1971
        %v2011 = vunpack.c.l.b16 %v1972
        %v2012 = vunpack.c.l.b16 %v1973
        %v2013 = vunpack.c.l.b16 %v1974
        %v2014 = vunpack.c.l.b16 %v1975
        %v2015 = vunpack.c.l.b16 %v1976
        %v2016 = vunpack.c.l.b16 %v1977
        %v2017 = vpack.c.b16 %v2002, %v2001
        %v2018 = vpack.c.b16 %v2004, %v2003
        %v2019 = vpack.c.b16 %v2006, %v2005
        %v2020 = vpack.c.b16 %v2008, %v2007
        %v2021 = vpack.c.b16 %v2010, %v2009
        %v2022 = vpack.c.b16 %v2012, %v2011
        %v2023 = vpack.c.b16 %v2014, %v2013
        %v2024 = vpack.c.b16 %v2016, %v2015
        %2033 = vmatprep.subr.bf16.mxu0 0
        %2034 = vmatpush1.bf16.msra.mxu0 %v2017
        %2035 = vmatprep.subr.bf16.mxu0 0
        %2036 = vmatpush1.bf16.msra.mxu0 %v2018
        %2037 = vmatprep.subr.bf16.mxu0 0
        %2038 = vmatpush1.bf16.msra.mxu0 %v2019
        %2039 = vmatprep.subr.bf16.mxu0 0
        %2040 = vmatpush1.bf16.msra.mxu0 %v2020
        %2041 = vmatprep.subr.bf16.mxu0 0
        %2042 = vmatpush1.bf16.msra.mxu0 %v2021
        %2043 = vmatprep.subr.bf16.mxu0 0
        %2044 = vmatpush1.bf16.msra.mxu0 %v2022
        %2045 = vmatprep.subr.bf16.mxu0 0
        %2046 = vmatpush1.bf16.msra.mxu0 %v2023
        %2047 = vmatprep.subr.bf16.mxu0 0
        %2048 = vmatpush1.bf16.msra.mxu0 %v2024
        %2049 = vmatprep.subr.bf16.mxu0 0
        %2050 = vmatpush1.bf16.msra.mxu0 0
        %2051 = vmatprep.subr.bf16.mxu0 0
        %2052 = vmatpush1.bf16.msra.mxu0 0
        %2053 = vmatprep.subr.bf16.mxu0 0
        %2054 = vmatpush1.bf16.msra.mxu0 0
        %2055 = vmatprep.subr.bf16.mxu0 0
        %2056 = vmatpush1.bf16.msra.mxu0 0
        %2057 = vmatprep.subr.bf16.mxu0 0
        %2058 = vmatpush1.bf16.msra.mxu0 0
        %2059 = vmatprep.subr.bf16.mxu0 0
        %2060 = vmatpush1.bf16.msra.mxu0 0
        %2061 = vmatprep.subr.bf16.mxu0 0
        %2062 = vmatpush1.bf16.msra.mxu0 0
        %2063 = vmatprep.subr.bf16.mxu0 0
        %2064 = vmatpush1.bf16.msra.mxu0 0
        %2065 = vmatprep.mubr.bf16.mxu0 0
        %2066 = vmatmul.mubr.bf16.gmra.mrb[0].mxu0 %v1961
        %v2067 = vpop.f32.mrb[0].mxu0
        %v2068 = vadd.f32 %v1983, %v2067
        %v2069 = vpop.f32.mrb[0].mxu0
        %v2070 = vpop.f32.mrb[0].mxu0
        %v2071 = vadd.f32 %v1983, %v2070
        %v2072 = vpop.f32.mrb[0].mxu0
        %2073 = vdwg.mxu0
        %2074 = vst [vmem:[%s539] sm:$0xff] %v2068
        %2075 = vst [vmem:[%s539 + $0x8] sm:$0xff] %v2071
        %s2076 = sand.u32 %s287, 1
        %s2077 = scalar_lea.sflag [#allocation4], %s2076
        %s2078 = sand.u32 %s287, 1
        %s2079 = smul.addr %s2078, 16
        %s2080 = scalar_lea.vmem [#allocation14], %s2079
        // Predicated region
        $region93: #{tpu_custom_call.1} parent=63 // pred_check
          %p2081 = pneg %p297
        $region94: #{tpu_custom_call.1} parent=63 // pred_check_branch
          %2083 = sbr.rel (%p2081) target = $region96
        $region95: #{tpu_custom_call.1} parent=63 // pred_region
          %s2085 = ssub.s32 256, 256
          %2086 = vsyncadd %s2077, %s2085
          %s2087 = smul.addr %s33, 2
          %s2088 = smul.addr %s2087, 128
          %s2089 = scalar_lea.hbm %s11, %s2088
          %s2090 = sshll.u32 %s2080, 4
          %s2091 = int_to_ptr.vmem [resolvable:$true] %s2090
          %2096 = dma.vmem_to_hbm [thread:$0]  %s2091, 256, %s2089, %s2077, 128, 128, 8
        $region96: #{tpu_custom_call.1} parent=63 // pred_fallthru
          _
      $region64: #{tpu_custom_call.1} parent=5 // pred_fallthru
        _
      %p2097 = scmp.le.s32.totalorder 2, %s28
      // Predicated region
      $region97: #{tpu_custom_call.1} parent=5 // pred_check
        %p2098 = pneg %p2097
      $region98: #{tpu_custom_call.1} parent=5 // pred_check_branch
        %2100 = sbr.rel (%p2098) target = $region100
      $region99: #{tpu_custom_call.1} parent=5 // pred_region
        %s2101 = ssub.s32 %s28, 2
        // Predicated region
        $region101: #{tpu_custom_call.1} parent=99 // pred_check
          %p2102 = pneg %p303
        $region102: #{tpu_custom_call.1} parent=99 // pred_check_branch
          %2104 = sbr.rel (%p2102) target = $region104
        $region103: #{tpu_custom_call.1} parent=99 // pred_region
          %s2105 = sand.u32 %s288, 1
          %s2106 = scalar_lea.sflag [#allocation4], %s2105
          %s2107 = sand.u32 %s288, 1
          %s2108 = smul.addr %s2107, 16
          %s2109 = scalar_lea.vmem [#allocation14], %s2108
          %2110 = dma.done %s2106, 256
        $region104: #{tpu_custom_call.1} parent=99 // pred_fallthru
          _
      $region100: #{tpu_custom_call.1} parent=5 // pred_fallthru
        _
    $region6: #{tpu_custom_call.1} parent=1 // loop_footer
      %s32 = sadd.s32 1, %s28
    $region7: #{tpu_custom_call.1} parent=1 // loop_footer_branch
      %27 = sbr.rel target = $region3
    $region8: #{tpu_custom_call.1} parent=1 // loop_exit
      _
    %2111 = vsyncpa [#allocation3], 1
    %s2112 = scalar_lea.sflag [#allocation3], 1
    %2113 = vsyncpa %s2112, 1
    %2114 = vsyncpa [#allocation6], 1
    %s2115 = scalar_lea.sflag [#allocation6], 1
    %2116 = vsyncpa %s2115, 1
    %2117 = vsyncpa [#allocation9], 1
    %2118 = vsyncpa [#allocation12], 1
    %2119 = vsyncpa [#allocation4], 1
    %s2120 = scalar_lea.sflag [#allocation4], 1
    %2121 = vsyncpa %s2120, 1

</llo_original>
